<compile_context>
chip_gen: v7x
topology: tpu7x:2x2x1
jax: 0.10.0
libtpu: 0.0.40
codegen_flags: <defaults>
</compile_context>

<pallas_src>
import functools

import jax
import jax.numpy as jnp
from jax.experimental import pallas as pl
from jax.experimental.pallas import tpu as pltpu


def _attention_kernel(x_ref, wqkv_ref, bqkv_ref, wproj_ref, bproj_ref, o_ref, acc_ref,
                      *, num_heads):
    TB, N, C = x_ref.shape
    hd = C // num_heads

    # ---- fused QKV projection over all TB windows: (TB*N, C) @ (C, 3C) -----------
    x2d = x_ref[...].reshape(TB * N, C).astype(jnp.bfloat16)
    qkv2d = jnp.dot(x2d, wqkv_ref[...], preferred_element_type=jnp.float32)
    qkv2d = qkv2d + bqkv_ref[0]                       # bias (scale already folded in)
    qkv = qkv2d.reshape(TB, N, 3 * C)                 # (TB, N, 3C), f32

    # ---- per-head attention, batched over the TB window dim ----------------------
    for h in range(num_heads):
        qh = qkv[:, :, 0 * C + h * hd:0 * C + (h + 1) * hd].astype(jnp.bfloat16)
        kh = qkv[:, :, 1 * C + h * hd:1 * C + (h + 1) * hd].astype(jnp.bfloat16)
        vh = qkv[:, :, 2 * C + h * hd:2 * C + (h + 1) * hd].astype(jnp.bfloat16)

        # scores: contract on head-dim (no explicit transpose -> MXU-direct)
        s = jnp.einsum('bnd,bmd->bnm', qh, kh,
                       preferred_element_type=jnp.float32)          # (TB, N, N) f32
        m = jnp.max(s, axis=-1, keepdims=True)
        p = jnp.exp(s - m)                                           # unnormalized
        rowsum = jnp.sum(p, axis=-1, keepdims=True)

        oh = jnp.einsum('bnm,bmd->bnd', p.astype(jnp.bfloat16), vh,
                        preferred_element_type=jnp.float32)          # (TB, N, hd) f32
        # deferred softmax normalization on the small output (EUP approx reciprocal)
        acc_ref[:, :, h * hd:(h + 1) * hd] = oh * pl.reciprocal(rowsum, approx=True)

    # ---- output projection over all TB windows: (TB*N, C) @ (C, C) ---------------
    out2d = acc_ref[...].reshape(TB * N, C).astype(jnp.bfloat16)
    y = jnp.dot(out2d, wproj_ref[...], preferred_element_type=jnp.float32)
    y = y + bproj_ref[0]
    o_ref[...] = y.reshape(TB, N, C).astype(o_ref.dtype)


def attention_pallas(x, wqkv, bqkv, wproj, bproj, *, num_heads, qk_scale=None,
                     window_batch=8):
    B_, N, C = x.shape
    head_dim = C // num_heads
    scale = qk_scale if qk_scale is not None else head_dim ** (-0.5)

    # largest window-batch TB <= window_batch that divides B_ (keeps blocks exact)
    TB = max(1, min(window_batch, B_))
    while B_ % TB:
        TB -= 1

    # Fold the qk scale into the q-columns of the (call-invariant) qkv projection,
    # and pre-cast weights to bf16 (halves weight DMA + residency; f32 accumulation
    # in-kernel keeps accuracy).
    col_scale = jnp.concatenate([jnp.full((C,), scale, dtype=jnp.float32),
                                 jnp.ones((2 * C,), dtype=jnp.float32)])
    wqkv_b = (wqkv.astype(jnp.float32) * col_scale[None, :]).astype(jnp.bfloat16)
    bqkv_b = (bqkv.astype(jnp.float32) * col_scale).reshape(1, 3 * C)
    wproj_b = wproj.astype(jnp.bfloat16)
    bproj_b = bproj.astype(jnp.float32).reshape(1, C)

    kernel = functools.partial(_attention_kernel, num_heads=num_heads)

    # NOTE: on v7x one could additionally mark the grid-invariant weight specs with
    # pipeline_mode=pl.Buffered(1) to single-buffer them; left at default here.
    return pl.pallas_call(
        kernel,
        out_shape=jax.ShapeDtypeStruct((B_, N, C), x.dtype),
        grid_spec=pltpu.PrefetchScalarGridSpec(
            num_scalar_prefetch=0,
            grid=(B_ // TB,),
            in_specs=[
                pl.BlockSpec((TB, N, C), lambda b: (b, 0, 0)),       # x windows
                pl.BlockSpec((C, 3 * C), lambda b: (0, 0)),          # Wqkv (bf16)
                pl.BlockSpec((1, 3 * C), lambda b: (0, 0)),          # bqkv (f32)
                pl.BlockSpec((C, C), lambda b: (0, 0)),              # Wproj (bf16)
                pl.BlockSpec((1, C), lambda b: (0, 0)),              # bproj (f32)
            ],
            out_specs=pl.BlockSpec((TB, N, C), lambda b: (b, 0, 0)),
            scratch_shapes=[pltpu.VMEM((TB, N, C), jnp.float32)],    # per-head writes
        ),
        compiler_params=pltpu.CompilerParams(
            dimension_semantics=("parallel",),
            vmem_limit_bytes=48 * 1024 * 1024),
    )(x, wqkv_b, bqkv_b, wproj_b, bproj_b)


def attention_reference(x, wqkv, bqkv, wproj, bproj, *, num_heads, qk_scale=None):
    """Pure-JAX f32 reference that mirrors the PyTorch forward (mask=None)."""
    B_, N, C = x.shape
    hd = C // num_heads
    scale = qk_scale if qk_scale is not None else hd ** (-0.5)

    qkv = x @ wqkv + bqkv                                    # (B_, N, 3C)
    qkv = qkv.reshape(B_, N, 3, num_heads, hd).transpose(2, 0, 3, 1, 4)
    q, k, v = qkv[0], qkv[1], qkv[2]                         # (B_, H, N, hd)
    q = q * scale
    attn = jnp.einsum("bhnd,bhmd->bhnm", q, k)
    attn = jax.nn.softmax(attn, axis=-1)
    out = jnp.einsum("bhnm,bhmd->bhnd", attn, v)             # (B_, H, N, hd)
    out = out.transpose(0, 2, 1, 3).reshape(B_, N, C)
    return out @ wproj + bproj


if __name__ == "__main__":
    # small shapes consistent with the module: (num_groups*B, tokens, channels)
    B_, N, C, H = 8, 8, 32, 4

    key = jax.random.PRNGKey(0)
    kx, kw1, kb1, kw2, kb2 = jax.random.split(key, 5)

    x = jax.random.normal(kx, (B_, N, C), dtype=jnp.float32)
    # deterministic synthetic params (match nn.Linear(dim, 3*dim) / nn.Linear(dim, dim))
    wqkv = jax.random.normal(kw1, (C, 3 * C), dtype=jnp.float32) * 0.05
    bqkv = jax.random.normal(kb1, (3 * C,), dtype=jnp.float32) * 0.05
    wproj = jax.random.normal(kw2, (C, C), dtype=jnp.float32) * 0.05
    bproj = jax.random.normal(kb2, (C,), dtype=jnp.float32) * 0.05

    out = attention_pallas(x, wqkv, bqkv, wproj, bproj, num_heads=H, window_batch=4)
    out = jax.block_until_ready(out)

    ref = attention_reference(x, wqkv, bqkv, wproj, bproj, num_heads=H)
    assert out.shape == (B_, N, C)
    # bf16 MXU operands + approx reciprocal => relaxed tolerance vs the f32 reference
    assert jnp.allclose(out, ref, atol=2e-2, rtol=2e-2), "mismatch vs reference"

    print("KERNEL_OK")
</pallas_src>

<mosaic_0001>
module attributes {stable_mosaic.version = 11 : i64} {
  func.func @_attention_kernel(%arg0: i32, %arg1: memref<4x8x32xf32, #tpu.memory_space<vmem>>, %arg2: memref<32x96xbf16, #tpu.memory_space<vmem>>, %arg3: memref<1x96xf32, #tpu.memory_space<vmem>>, %arg4: memref<32x32xbf16, #tpu.memory_space<vmem>>, %arg5: memref<1x32xf32, #tpu.memory_space<vmem>>, %arg6: memref<4x8x32xf32, #tpu.memory_space<vmem>>, %arg7: memref<4x8x32xf32, #tpu.memory_space<vmem>>) attributes {dimension_semantics = [#tpu.dimension_semantics<parallel>], iteration_bounds = array<i64: 2>, scalar_prefetch = 0 : i64, scratch_operands = 1 : i64, tpu.core_type = #tpu.core_type<tc>, window_params = [{transform_indices = @transform_0, window_bounds = array<i64: 4, 8, 32>}, {pipeline_mode = #tpu.pipeline_mode<synchronous>, transform_indices = @transform_1, window_bounds = array<i64: 32, 96>}, {pipeline_mode = #tpu.pipeline_mode<synchronous>, transform_indices = @transform_2, window_bounds = array<i64: 1, 96>}, {pipeline_mode = #tpu.pipeline_mode<synchronous>, transform_indices = @transform_3, window_bounds = array<i64: 32, 32>}, {pipeline_mode = #tpu.pipeline_mode<synchronous>, transform_indices = @transform_4, window_bounds = array<i64: 1, 32>}, {transform_indices = @transform_5, window_bounds = array<i64: 4, 8, 32>}]} {
    %c0 = arith.constant 0 : index
    %c0_0 = arith.constant 0 : index
    %c0_1 = arith.constant 0 : index
    %0 = vector.load %arg1[%c0, %c0_0, %c0_1] : memref<4x8x32xf32, #tpu.memory_space<vmem>>, vector<4x8x32xf32>
    %1 = vector.shape_cast %0 : vector<4x8x32xf32> to vector<32x32xf32>
    %2 = arith.truncf %1 : vector<32x32xf32> to vector<32x32xbf16>
    %c0_2 = arith.constant 0 : index
    %c0_3 = arith.constant 0 : index
    %3 = vector.load %arg2[%c0_2, %c0_3] : memref<32x96xbf16, #tpu.memory_space<vmem>>, vector<32x96xbf16>
    %cst = arith.constant dense<0.000000e+00> : vector<32x96xf32>
    %4 = tpu.matmul %2, %3, %cst {dimension_numbers = #tpu.dot_dimension_numbers<[1], [0], [0], [1], [0, 0, 1, 1], [], []>} : vector<32x32xbf16>, vector<32x96xbf16>, vector<32x96xf32> -> vector<32x96xf32>
    %c0_4 = arith.constant 0 : index
    %c0_5 = arith.constant 0 : index
    %5 = vector.load %arg3[%c0_4, %c0_5] : memref<1x96xf32, #tpu.memory_space<vmem>>, vector<1x96xf32>
    %6 = vector.shape_cast %5 : vector<1x96xf32> to vector<96xf32>
    %7 = vector.shape_cast %6 : vector<96xf32> to vector<1x96xf32>
    %8 = vector.broadcast %7 : vector<1x96xf32> to vector<32x96xf32>
    %9 = arith.addf %4, %8 : vector<32x96xf32>
    %10 = vector.shape_cast %9 : vector<32x96xf32> to vector<4x8x96xf32>
    %11 = vector.extract_strided_slice %10 {offsets = [0, 0, 0], sizes = [4, 8, 8], strides = [1, 1, 1]} : vector<4x8x96xf32> to vector<4x8x8xf32>
    %12 = arith.truncf %11 : vector<4x8x8xf32> to vector<4x8x8xbf16>
    %13 = vector.extract_strided_slice %10 {offsets = [0, 0, 32], sizes = [4, 8, 8], strides = [1, 1, 1]} : vector<4x8x96xf32> to vector<4x8x8xf32>
    %14 = arith.truncf %13 : vector<4x8x8xf32> to vector<4x8x8xbf16>
    %15 = vector.extract_strided_slice %10 {offsets = [0, 0, 64], sizes = [4, 8, 8], strides = [1, 1, 1]} : vector<4x8x96xf32> to vector<4x8x8xf32>
    %16 = arith.truncf %15 : vector<4x8x8xf32> to vector<4x8x8xbf16>
    "tpu.trace_start"() <{level = 10 : i32, message = "bnd,bmd->bnm"}> : () -> ()
    %cst_6 = arith.constant dense<0.000000e+00> : vector<4x8x8xf32>
    %17 = tpu.matmul %12, %14, %cst_6 {dimension_numbers = #tpu.dot_dimension_numbers<[2], [2], [1], [1], [0, 0, 0, 1, 1, 1], [0], [0]>} : vector<4x8x8xbf16>, vector<4x8x8xbf16>, vector<4x8x8xf32> -> vector<4x8x8xf32>
    "tpu.trace_stop"() : () -> ()
    %cst_7 = arith.constant dense<0xFF800000> : vector<4x8xf32>
    %18 = vector.multi_reduction <maximumf>, %17, %cst_7 [2] : vector<4x8x8xf32> to vector<4x8xf32>
    %19 = vector.shape_cast %18 : vector<4x8xf32> to vector<4x8x1xf32>
    %20 = vector.broadcast %19 : vector<4x8x1xf32> to vector<4x8x8xf32>
    %21 = arith.subf %17, %20 : vector<4x8x8xf32>
    %22 = math.exp %21 : vector<4x8x8xf32>
    %cst_8 = arith.constant dense<0.000000e+00> : vector<4x8xf32>
    %23 = vector.multi_reduction <add>, %22, %cst_8 [2] : vector<4x8x8xf32> to vector<4x8xf32>
    %24 = vector.shape_cast %23 : vector<4x8xf32> to vector<4x8x1xf32>
    %25 = arith.truncf %22 : vector<4x8x8xf32> to vector<4x8x8xbf16>
    "tpu.trace_start"() <{level = 10 : i32, message = "bnm,bmd->bnd"}> : () -> ()
    %cst_9 = arith.constant dense<0.000000e+00> : vector<4x8x8xf32>
    %26 = tpu.matmul %25, %16, %cst_9 {dimension_numbers = #tpu.dot_dimension_numbers<[2], [1], [1], [2], [0, 0, 0, 1, 1, 2], [0], [0]>} : vector<4x8x8xbf16>, vector<4x8x8xbf16>, vector<4x8x8xf32> -> vector<4x8x8xf32>
    "tpu.trace_stop"() : () -> ()
    %27 = tpu.reciprocal %24 {approx = true} : vector<4x8x1xf32> -> vector<4x8x1xf32>
    %28 = vector.broadcast %27 : vector<4x8x1xf32> to vector<4x8x8xf32>
    %29 = arith.mulf %26, %28 : vector<4x8x8xf32>
    %c0_10 = arith.constant 0 : index
    %c0_11 = arith.constant 0 : index
    %c0_12 = arith.constant 0 : index
    %30 = vector.load %arg7[%c0_10, %c0_11, %c0_12] : memref<4x8x32xf32, #tpu.memory_space<vmem>>, vector<4x8x8xf32>
    tpu.vector_store %arg7[%c0_10, %c0_11, %c0_12], %29 {strides = array<i32>} : memref<4x8x32xf32, #tpu.memory_space<vmem>>, vector<4x8x8xf32>,
    %31 = vector.extract_strided_slice %10 {offsets = [0, 0, 8], sizes = [4, 8, 8], strides = [1, 1, 1]} : vector<4x8x96xf32> to vector<4x8x8xf32>
    %32 = arith.truncf %31 : vector<4x8x8xf32> to vector<4x8x8xbf16>
    %33 = vector.extract_strided_slice %10 {offsets = [0, 0, 40], sizes = [4, 8, 8], strides = [1, 1, 1]} : vector<4x8x96xf32> to vector<4x8x8xf32>
    %34 = arith.truncf %33 : vector<4x8x8xf32> to vector<4x8x8xbf16>
    %35 = vector.extract_strided_slice %10 {offsets = [0, 0, 72], sizes = [4, 8, 8], strides = [1, 1, 1]} : vector<4x8x96xf32> to vector<4x8x8xf32>
    %36 = arith.truncf %35 : vector<4x8x8xf32> to vector<4x8x8xbf16>
    "tpu.trace_start"() <{level = 10 : i32, message = "bnd,bmd->bnm"}> : () -> ()
    %cst_13 = arith.constant dense<0.000000e+00> : vector<4x8x8xf32>
    %37 = tpu.matmul %32, %34, %cst_13 {dimension_numbers = #tpu.dot_dimension_numbers<[2], [2], [1], [1], [0, 0, 0, 1, 1, 1], [0], [0]>} : vector<4x8x8xbf16>, vector<4x8x8xbf16>, vector<4x8x8xf32> -> vector<4x8x8xf32>
    "tpu.trace_stop"() : () -> ()
    %cst_14 = arith.constant dense<0xFF800000> : vector<4x8xf32>
    %38 = vector.multi_reduction <maximumf>, %37, %cst_14 [2] : vector<4x8x8xf32> to vector<4x8xf32>
    %39 = vector.shape_cast %38 : vector<4x8xf32> to vector<4x8x1xf32>
    %40 = vector.broadcast %39 : vector<4x8x1xf32> to vector<4x8x8xf32>
    %41 = arith.subf %37, %40 : vector<4x8x8xf32>
    %42 = math.exp %41 : vector<4x8x8xf32>
    %cst_15 = arith.constant dense<0.000000e+00> : vector<4x8xf32>
    %43 = vector.multi_reduction <add>, %42, %cst_15 [2] : vector<4x8x8xf32> to vector<4x8xf32>
    %44 = vector.shape_cast %43 : vector<4x8xf32> to vector<4x8x1xf32>
    %45 = arith.truncf %42 : vector<4x8x8xf32> to vector<4x8x8xbf16>
    "tpu.trace_start"() <{level = 10 : i32, message = "bnm,bmd->bnd"}> : () -> ()
    %cst_16 = arith.constant dense<0.000000e+00> : vector<4x8x8xf32>
    %46 = tpu.matmul %45, %36, %cst_16 {dimension_numbers = #tpu.dot_dimension_numbers<[2], [1], [1], [2], [0, 0, 0, 1, 1, 2], [0], [0]>} : vector<4x8x8xbf16>, vector<4x8x8xbf16>, vector<4x8x8xf32> -> vector<4x8x8xf32>
    "tpu.trace_stop"() : () -> ()
    %47 = tpu.reciprocal %44 {approx = true} : vector<4x8x1xf32> -> vector<4x8x1xf32>
    %48 = vector.broadcast %47 : vector<4x8x1xf32> to vector<4x8x8xf32>
    %49 = arith.mulf %46, %48 : vector<4x8x8xf32>
    %c0_17 = arith.constant 0 : index
    %c0_18 = arith.constant 0 : index
    %c8 = arith.constant 8 : index
    %50 = vector.load %arg7[%c0_17, %c0_18, %c8] : memref<4x8x32xf32, #tpu.memory_space<vmem>>, vector<4x8x8xf32>
    tpu.vector_store %arg7[%c0_17, %c0_18, %c8], %49 {strides = array<i32>} : memref<4x8x32xf32, #tpu.memory_space<vmem>>, vector<4x8x8xf32>,
    %51 = vector.extract_strided_slice %10 {offsets = [0, 0, 16], sizes = [4, 8, 8], strides = [1, 1, 1]} : vector<4x8x96xf32> to vector<4x8x8xf32>
    %52 = arith.truncf %51 : vector<4x8x8xf32> to vector<4x8x8xbf16>
    %53 = vector.extract_strided_slice %10 {offsets = [0, 0, 48], sizes = [4, 8, 8], strides = [1, 1, 1]} : vector<4x8x96xf32> to vector<4x8x8xf32>
    %54 = arith.truncf %53 : vector<4x8x8xf32> to vector<4x8x8xbf16>
    %55 = vector.extract_strided_slice %10 {offsets = [0, 0, 80], sizes = [4, 8, 8], strides = [1, 1, 1]} : vector<4x8x96xf32> to vector<4x8x8xf32>
    %56 = arith.truncf %55 : vector<4x8x8xf32> to vector<4x8x8xbf16>
    "tpu.trace_start"() <{level = 10 : i32, message = "bnd,bmd->bnm"}> : () -> ()
    %cst_19 = arith.constant dense<0.000000e+00> : vector<4x8x8xf32>
    %57 = tpu.matmul %52, %54, %cst_19 {dimension_numbers = #tpu.dot_dimension_numbers<[2], [2], [1], [1], [0, 0, 0, 1, 1, 1], [0], [0]>} : vector<4x8x8xbf16>, vector<4x8x8xbf16>, vector<4x8x8xf32> -> vector<4x8x8xf32>
    "tpu.trace_stop"() : () -> ()
    %cst_20 = arith.constant dense<0xFF800000> : vector<4x8xf32>
    %58 = vector.multi_reduction <maximumf>, %57, %cst_20 [2] : vector<4x8x8xf32> to vector<4x8xf32>
    %59 = vector.shape_cast %58 : vector<4x8xf32> to vector<4x8x1xf32>
    %60 = vector.broadcast %59 : vector<4x8x1xf32> to vector<4x8x8xf32>
    %61 = arith.subf %57, %60 : vector<4x8x8xf32>
    %62 = math.exp %61 : vector<4x8x8xf32>
    %cst_21 = arith.constant dense<0.000000e+00> : vector<4x8xf32>
    %63 = vector.multi_reduction <add>, %62, %cst_21 [2] : vector<4x8x8xf32> to vector<4x8xf32>
    %64 = vector.shape_cast %63 : vector<4x8xf32> to vector<4x8x1xf32>
    %65 = arith.truncf %62 : vector<4x8x8xf32> to vector<4x8x8xbf16>
    "tpu.trace_start"() <{level = 10 : i32, message = "bnm,bmd->bnd"}> : () -> ()
    %cst_22 = arith.constant dense<0.000000e+00> : vector<4x8x8xf32>
    %66 = tpu.matmul %65, %56, %cst_22 {dimension_numbers = #tpu.dot_dimension_numbers<[2], [1], [1], [2], [0, 0, 0, 1, 1, 2], [0], [0]>} : vector<4x8x8xbf16>, vector<4x8x8xbf16>, vector<4x8x8xf32> -> vector<4x8x8xf32>
    "tpu.trace_stop"() : () -> ()
    %67 = tpu.reciprocal %64 {approx = true} : vector<4x8x1xf32> -> vector<4x8x1xf32>
    %68 = vector.broadcast %67 : vector<4x8x1xf32> to vector<4x8x8xf32>
    %69 = arith.mulf %66, %68 : vector<4x8x8xf32>
    %c0_23 = arith.constant 0 : index
    %c0_24 = arith.constant 0 : index
    %c16 = arith.constant 16 : index
    %70 = vector.load %arg7[%c0_23, %c0_24, %c16] : memref<4x8x32xf32, #tpu.memory_space<vmem>>, vector<4x8x8xf32>
    tpu.vector_store %arg7[%c0_23, %c0_24, %c16], %69 {strides = array<i32>} : memref<4x8x32xf32, #tpu.memory_space<vmem>>, vector<4x8x8xf32>,
    %71 = vector.extract_strided_slice %10 {offsets = [0, 0, 24], sizes = [4, 8, 8], strides = [1, 1, 1]} : vector<4x8x96xf32> to vector<4x8x8xf32>
    %72 = arith.truncf %71 : vector<4x8x8xf32> to vector<4x8x8xbf16>
    %73 = vector.extract_strided_slice %10 {offsets = [0, 0, 56], sizes = [4, 8, 8], strides = [1, 1, 1]} : vector<4x8x96xf32> to vector<4x8x8xf32>
    %74 = arith.truncf %73 : vector<4x8x8xf32> to vector<4x8x8xbf16>
    %75 = vector.extract_strided_slice %10 {offsets = [0, 0, 88], sizes = [4, 8, 8], strides = [1, 1, 1]} : vector<4x8x96xf32> to vector<4x8x8xf32>
    %76 = arith.truncf %75 : vector<4x8x8xf32> to vector<4x8x8xbf16>
    "tpu.trace_start"() <{level = 10 : i32, message = "bnd,bmd->bnm"}> : () -> ()
    %cst_25 = arith.constant dense<0.000000e+00> : vector<4x8x8xf32>
    %77 = tpu.matmul %72, %74, %cst_25 {dimension_numbers = #tpu.dot_dimension_numbers<[2], [2], [1], [1], [0, 0, 0, 1, 1, 1], [0], [0]>} : vector<4x8x8xbf16>, vector<4x8x8xbf16>, vector<4x8x8xf32> -> vector<4x8x8xf32>
    "tpu.trace_stop"() : () -> ()
    %cst_26 = arith.constant dense<0xFF800000> : vector<4x8xf32>
    %78 = vector.multi_reduction <maximumf>, %77, %cst_26 [2] : vector<4x8x8xf32> to vector<4x8xf32>
    %79 = vector.shape_cast %78 : vector<4x8xf32> to vector<4x8x1xf32>
    %80 = vector.broadcast %79 : vector<4x8x1xf32> to vector<4x8x8xf32>
    %81 = arith.subf %77, %80 : vector<4x8x8xf32>
    %82 = math.exp %81 : vector<4x8x8xf32>
    %cst_27 = arith.constant dense<0.000000e+00> : vector<4x8xf32>
    %83 = vector.multi_reduction <add>, %82, %cst_27 [2] : vector<4x8x8xf32> to vector<4x8xf32>
    %84 = vector.shape_cast %83 : vector<4x8xf32> to vector<4x8x1xf32>
    %85 = arith.truncf %82 : vector<4x8x8xf32> to vector<4x8x8xbf16>
    "tpu.trace_start"() <{level = 10 : i32, message = "bnm,bmd->bnd"}> : () -> ()
    %cst_28 = arith.constant dense<0.000000e+00> : vector<4x8x8xf32>
    %86 = tpu.matmul %85, %76, %cst_28 {dimension_numbers = #tpu.dot_dimension_numbers<[2], [1], [1], [2], [0, 0, 0, 1, 1, 2], [0], [0]>} : vector<4x8x8xbf16>, vector<4x8x8xbf16>, vector<4x8x8xf32> -> vector<4x8x8xf32>
    "tpu.trace_stop"() : () -> ()
    %87 = tpu.reciprocal %84 {approx = true} : vector<4x8x1xf32> -> vector<4x8x1xf32>
    %88 = vector.broadcast %87 : vector<4x8x1xf32> to vector<4x8x8xf32>
    %89 = arith.mulf %86, %88 : vector<4x8x8xf32>
    %c0_29 = arith.constant 0 : index
    %c0_30 = arith.constant 0 : index
    %c24 = arith.constant 24 : index
    %90 = vector.load %arg7[%c0_29, %c0_30, %c24] : memref<4x8x32xf32, #tpu.memory_space<vmem>>, vector<4x8x8xf32>
    tpu.vector_store %arg7[%c0_29, %c0_30, %c24], %89 {strides = array<i32>} : memref<4x8x32xf32, #tpu.memory_space<vmem>>, vector<4x8x8xf32>,
    %c0_31 = arith.constant 0 : index
    %c0_32 = arith.constant 0 : index
    %c0_33 = arith.constant 0 : index
    %91 = vector.load %arg7[%c0_31, %c0_32, %c0_33] : memref<4x8x32xf32, #tpu.memory_space<vmem>>, vector<4x8x32xf32>
    %92 = vector.shape_cast %91 : vector<4x8x32xf32> to vector<32x32xf32>
    %93 = arith.truncf %92 : vector<32x32xf32> to vector<32x32xbf16>
    %c0_34 = arith.constant 0 : index
    %c0_35 = arith.constant 0 : index
    %94 = vector.load %arg4[%c0_34, %c0_35] : memref<32x32xbf16, #tpu.memory_space<vmem>>, vector<32x32xbf16>
    %cst_36 = arith.constant dense<0.000000e+00> : vector<32x32xf32>
    %95 = tpu.matmul %93, %94, %cst_36 {dimension_numbers = #tpu.dot_dimension_numbers<[1], [0], [0], [1], [0, 0, 1, 1], [], []>} : vector<32x32xbf16>, vector<32x32xbf16>, vector<32x32xf32> -> vector<32x32xf32>
    %c0_37 = arith.constant 0 : index
    %c0_38 = arith.constant 0 : index
    %96 = vector.load %arg5[%c0_37, %c0_38] : memref<1x32xf32, #tpu.memory_space<vmem>>, vector<1x32xf32>
    %97 = vector.shape_cast %96 : vector<1x32xf32> to vector<32xf32>
    %98 = vector.shape_cast %97 : vector<32xf32> to vector<1x32xf32>
    %99 = vector.broadcast %98 : vector<1x32xf32> to vector<32x32xf32>
    %100 = arith.addf %95, %99 : vector<32x32xf32>
    %101 = vector.shape_cast %100 : vector<32x32xf32> to vector<4x8x32xf32>
    %c0_39 = arith.constant 0 : index
    %c0_40 = arith.constant 0 : index
    %c0_41 = arith.constant 0 : index
    %102 = vector.load %arg6[%c0_39, %c0_40, %c0_41] : memref<4x8x32xf32, #tpu.memory_space<vmem>>, vector<4x8x32xf32>
    tpu.vector_store %arg6[%c0_39, %c0_40, %c0_41], %101 {strides = array<i32>} : memref<4x8x32xf32, #tpu.memory_space<vmem>>, vector<4x8x32xf32>,
    return
  }
  func.func @transform_0(%arg0: i32) -> (i32, i32, i32) {
    %c0_i32 = arith.constant 0 : i32
    %c0_i32_0 = arith.constant 0 : i32
    %c0_i32_1 = arith.constant 0 : i32
    return %arg0, %c0_i32, %c0_i32_0 : i32, i32, i32
  }
  func.func @transform_1(%arg0: i32) -> (i32, i32) {
    %c0_i32 = arith.constant 0 : i32
    %c0_i32_0 = arith.constant 0 : i32
    %c0_i32_1 = arith.constant 0 : i32
    return %c0_i32, %c0_i32_0 : i32, i32
  }
  func.func @transform_2(%arg0: i32) -> (i32, i32) {
    %c0_i32 = arith.constant 0 : i32
    %c0_i32_0 = arith.constant 0 : i32
    %c0_i32_1 = arith.constant 0 : i32
    return %c0_i32, %c0_i32_0 : i32, i32
  }
  func.func @transform_3(%arg0: i32) -> (i32, i32) {
    %c0_i32 = arith.constant 0 : i32
    %c0_i32_0 = arith.constant 0 : i32
    %c0_i32_1 = arith.constant 0 : i32
    return %c0_i32, %c0_i32_0 : i32, i32
  }
  func.func @transform_4(%arg0: i32) -> (i32, i32) {
    %c0_i32 = arith.constant 0 : i32
    %c0_i32_0 = arith.constant 0 : i32
    %c0_i32_1 = arith.constant 0 : i32
    return %c0_i32, %c0_i32_0 : i32, i32
  }
  func.func @transform_5(%arg0: i32) -> (i32, i32, i32) {
    %c0_i32 = arith.constant 0 : i32
    %c0_i32_0 = arith.constant 0 : i32
    %c0_i32_1 = arith.constant 0 : i32
    return %arg0, %c0_i32, %c0_i32_0 : i32, i32, i32
  }
}

</mosaic_0001>

<llo_original>
// kernel: tpu_custom_call.1
$region0: #{tpu_custom_call.1}
  #allocation0 [shape = 'u32[]', space=smem, size = 0x4, offset = 0x4, fixed_abs, tag = 'smem constant byte address 0x4 - core index']
  #allocation1 [shape = 'u32[144,128]{1,0:T(1,128)}', space=vmem, size = 0x12000, scoped, tag = 'internal scratch']
  #allocation2 [shape = 'f32[4,8,32]{2,1,0:T(8,128)}', space=vmem, size = 0x4000, scoped, tag = 'scratch operand']
  %s0 = inlined_call_operand.hbm [shape: f32[8,8,32], index: 0, kind: input, shape index: {}]
  %s1 = inlined_call_operand.hbm [shape: bf16[32,96], index: 1, kind: input, shape index: {}]
  %s2 = inlined_call_operand.vmem [shape: f32[1,96], index: 2, kind: input, shape index: {}]
  %s3 = inlined_call_operand.hbm [shape: bf16[32,32], index: 3, kind: input, shape index: {}]
  %s4 = inlined_call_operand.vmem [shape: f32[1,32], index: 4, kind: input, shape index: {}]
  %s5 = inlined_call_operand.hbm [shape: f32[8,8,32], index: 5, kind: output, shape index: {}]
  %s6 = sld [smem:[#allocation0]]
  $region65: #{tpu_custom_call.1} parent=0
    _
  %s8 = ssub.s32 1, %s6
  %s9 = scalar_select 0, %s8, %s6
  $region1: #{tpu_custom_call.1} parent=0
    #allocation3 [shape = 'u8[32768]{0}', space=vmem, size = 0x8000, scoped, tag = 'input window, operand 0']
    #allocation4 [shape = 's32[2]{0}', space=sflag, size = 0x8, scoped, tag = 'scoped memory for tpu_custom_call.1']
    #allocation5 [shape = 's32[2]{0}', space=sflag, size = 0x8, scoped, tag = 'scoped memory for tpu_custom_call.1']
    #allocation6 [shape = 'u8[8192]{0}', space=vmem, size = 0x2000, scoped, tag = 'input window, operand 1, single buffered']
    #allocation7 [shape = 's32[1]{0}', space=sflag, size = 0x4, scoped, tag = 'scoped memory for tpu_custom_call.1']
    #allocation8 [shape = 'u8[8192]{0}', space=vmem, size = 0x2000, scoped, tag = 'input window, operand 3, single buffered']
    #allocation9 [shape = 'u8[32768]{0}', space=vmem, size = 0x8000, scoped, tag = 'output window, operand 0']
    %10 = vsyncpa [#allocation4], 0
    %s11 = scalar_lea.sflag [#allocation4], 1
    %12 = vsyncpa %s11, 0
    %13 = vsyncpa [#allocation7], 0
    %14 = vsyncpa [#allocation5], 0
    %s15 = scalar_lea.sflag [#allocation5], 1
    %16 = vsyncpa %s15, 0
    loop: start=0, step=1, limit=4
    $region2: #{tpu_custom_call.1} parent=1 // loop_pre_header
      _
    $region3: #{tpu_custom_call.1} parent=1 // loop_header
      %s18 = sphi 0, %s22
      %p19 = scmp.ge.s32.totalorder %s18, 4
      %s28 = sphi 0, %s30
      %s31 = sphi 0, %s28
      %s32 = sphi 0, %s31
      %s48 = sphi 0, %s32
      %s52 = sphi 0, %s52
      %s54 = sphi 0, %s52
      %s55 = sphi 0, %s54
      %s69 = sphi 0, %s55
      %s73 = sphi 0, %s73
      %s75 = sphi 0, %s73
      %s76 = sphi 0, %s75
      %s90 = sphi 0, %s76
      %s94 = sphi 0, %s94
      %s96 = sphi 0, %s94
      %s97 = sphi 0, %s96
      %s111 = sphi 0, %s97
      %s115 = sphi 0, %s115
      %s117 = sphi 0, %s115
      %s118 = sphi 0, %s117
      %s132 = sphi 0, %s118
      %s138 = sphi 0, %s140
      %s141 = sphi 0, %s138
      %s142 = sphi 0, %s141
      %s158 = sphi 0, %s142
    $region4: #{tpu_custom_call.1} parent=1 // loop_header_branch
      %21 = sbr.rel (%p19) target = $region8
    $region5: #{tpu_custom_call.1} parent=1 // loop_body
      %s23 = ssub.s32 %s18, 1
      %s24 = ssub.s32 %s18, 2
      %s25 = sadd.s32 %s18, 1
      %s26 = ssub.s32 %s18, %s25
      %p27 = scmp.eq.s32.totalorder %s26, 0
      %s29 = sadd.s32 %s28, 1
      %s30 = scalar_select %p27, %s28, %s29
      %p33 = pneg %p27
      %p34 = scmp.eq.s32.totalorder %s18, 1
      %p35 = por %p33, %p34
      %p36 = scmp.ne.s32.totalorder %s28, %s31
      %p37 = scmp.eq.s32.totalorder %s18, 0
      %p38 = por %p36, %p37
      %p39 = scmp.ne.s32.totalorder %s28, %s31
      %p40 = scmp.eq.s32.totalorder %s23, 1
      %p41 = por %p39, %p40
      %p42 = scmp.ne.s32.totalorder %s31, %s32
      %p43 = scmp.eq.s32.totalorder %s23, 0
      %p44 = por %p42, %p43
      %p45 = scmp.ne.s32.totalorder %s31, %s32
      %p46 = scmp.eq.s32.totalorder %s24, 1
      %p47 = por %p45, %p46
      %p49 = scmp.ne.s32.totalorder %s32, %s48
      %p50 = scmp.eq.s32.totalorder %s24, 0
      %p51 = por %p49, %p50
      %s53 = sadd.s32 %s52, 1
      %p56 = scmp.eq.s32.totalorder %s18, 1
      %p57 = scmp.ne.s32.totalorder %s52, %s54
      %p58 = scmp.eq.s32.totalorder %s18, 0
      %p59 = por %p57, %p58
      %p60 = scmp.ne.s32.totalorder %s52, %s54
      %p61 = scmp.eq.s32.totalorder %s23, 1
      %p62 = por %p60, %p61
      %p63 = scmp.ne.s32.totalorder %s54, %s55
      %p64 = scmp.eq.s32.totalorder %s23, 0
      %p65 = por %p63, %p64
      %p66 = scmp.ne.s32.totalorder %s54, %s55
      %p67 = scmp.eq.s32.totalorder %s24, 1
      %p68 = por %p66, %p67
      %p70 = scmp.ne.s32.totalorder %s55, %s69
      %p71 = scmp.eq.s32.totalorder %s24, 0
      %p72 = por %p70, %p71
      %s74 = sadd.s32 %s73, 1
      %p77 = scmp.eq.s32.totalorder %s18, 1
      %p78 = scmp.ne.s32.totalorder %s73, %s75
      %p79 = scmp.eq.s32.totalorder %s18, 0
      %p80 = por %p78, %p79
      %p81 = scmp.ne.s32.totalorder %s73, %s75
      %p82 = scmp.eq.s32.totalorder %s23, 1
      %p83 = por %p81, %p82
      %p84 = scmp.ne.s32.totalorder %s75, %s76
      %p85 = scmp.eq.s32.totalorder %s23, 0
      %p86 = por %p84, %p85
      %p87 = scmp.ne.s32.totalorder %s75, %s76
      %p88 = scmp.eq.s32.totalorder %s24, 1
      %p89 = por %p87, %p88
      %p91 = scmp.ne.s32.totalorder %s76, %s90
      %p92 = scmp.eq.s32.totalorder %s24, 0
      %p93 = por %p91, %p92
      %s95 = sadd.s32 %s94, 1
      %p98 = scmp.eq.s32.totalorder %s18, 1
      %p99 = scmp.ne.s32.totalorder %s94, %s96
      %p100 = scmp.eq.s32.totalorder %s18, 0
      %p101 = por %p99, %p100
      %p102 = scmp.ne.s32.totalorder %s94, %s96
      %p103 = scmp.eq.s32.totalorder %s23, 1
      %p104 = por %p102, %p103
      %p105 = scmp.ne.s32.totalorder %s96, %s97
      %p106 = scmp.eq.s32.totalorder %s23, 0
      %p107 = por %p105, %p106
      %p108 = scmp.ne.s32.totalorder %s96, %s97
      %p109 = scmp.eq.s32.totalorder %s24, 1
      %p110 = por %p108, %p109
      %p112 = scmp.ne.s32.totalorder %s97, %s111
      %p113 = scmp.eq.s32.totalorder %s24, 0
      %p114 = por %p112, %p113
      %s116 = sadd.s32 %s115, 1
      %p119 = scmp.eq.s32.totalorder %s18, 1
      %p120 = scmp.ne.s32.totalorder %s115, %s117
      %p121 = scmp.eq.s32.totalorder %s18, 0
      %p122 = por %p120, %p121
      %p123 = scmp.ne.s32.totalorder %s115, %s117
      %p124 = scmp.eq.s32.totalorder %s23, 1
      %p125 = por %p123, %p124
      %p126 = scmp.ne.s32.totalorder %s117, %s118
      %p127 = scmp.eq.s32.totalorder %s23, 0
      %p128 = por %p126, %p127
      %p129 = scmp.ne.s32.totalorder %s117, %s118
      %p130 = scmp.eq.s32.totalorder %s24, 1
      %p131 = por %p129, %p130
      %p133 = scmp.ne.s32.totalorder %s118, %s132
      %p134 = scmp.eq.s32.totalorder %s24, 0
      %p135 = por %p133, %p134
      %s136 = ssub.s32 %s18, %s25
      %p137 = scmp.eq.s32.totalorder %s136, 0
      %s139 = sadd.s32 %s138, 1
      %s140 = scalar_select %p137, %s138, %s139
      %p143 = pneg %p137
      %p144 = scmp.eq.s32.totalorder %s18, 1
      %p145 = por %p143, %p144
      %p146 = scmp.ne.s32.totalorder %s138, %s141
      %p147 = scmp.eq.s32.totalorder %s18, 0
      %p148 = por %p146, %p147
      %p149 = scmp.ne.s32.totalorder %s138, %s141
      %p150 = scmp.eq.s32.totalorder %s23, 1
      %p151 = por %p149, %p150
      %p152 = scmp.ne.s32.totalorder %s141, %s142
      %p153 = scmp.eq.s32.totalorder %s23, 0
      %p154 = por %p152, %p153
      %p155 = scmp.ne.s32.totalorder %s141, %s142
      %p156 = scmp.eq.s32.totalorder %s24, 1
      %p157 = por %p155, %p156
      %p159 = scmp.ne.s32.totalorder %s142, %s158
      %p160 = scmp.eq.s32.totalorder %s24, 0
      %p161 = por %p159, %p160
      %p162 = scmp.le.s32.totalorder 1, %s18
      %p163 = scmp.lt.s32.totalorder %s18, 3
      %p164 = pnand %p162, %p163
      %p165 = pneg %p164
      // Predicated region
      $region9: #{tpu_custom_call.1} parent=5 // pred_check
        _
      $region10: #{tpu_custom_call.1} parent=5 // pred_check_branch
        %167 = sbr.rel (%p164) target = $region12
      $region11: #{tpu_custom_call.1} parent=5 // pred_region
        %s168 = ssub.s32 %s18, 1
        // Predicated region
        $region13: #{tpu_custom_call.1} parent=11 // pred_check
          %p169 = pneg %p65
        $region14: #{tpu_custom_call.1} parent=11 // pred_check_branch
          %171 = sbr.rel (%p169) target = $region16
        $region15: #{tpu_custom_call.1} parent=11 // pred_region
          %s173 = ssub.s32 256, 256
          %174 = vsyncadd [#allocation7], %s173
          %s175 = sshll.u32 [#allocation6], 4
          %s176 = int_to_ptr.vmem [resolvable:$true] %s175
          %181 = dma.hbm_to_vmem [thread:$0]  %s1, 256, %s176, [#allocation7], 64, 64, 4
        $region16: #{tpu_custom_call.1} parent=11 // pred_fallthru
          _
        // Predicated region
        $region17: #{tpu_custom_call.1} parent=11 // pred_check
          %p182 = pneg %p86
        $region18: #{tpu_custom_call.1} parent=11 // pred_check_branch
          %184 = sbr.rel (%p182) target = $region20
        $region19: #{tpu_custom_call.1} parent=11 // pred_region
          _
        $region20: #{tpu_custom_call.1} parent=11 // pred_fallthru
          _
        // Predicated region
        $region21: #{tpu_custom_call.1} parent=11 // pred_check
          %p185 = pneg %p107
        $region22: #{tpu_custom_call.1} parent=11 // pred_check_branch
          %187 = sbr.rel (%p185) target = $region24
        $region23: #{tpu_custom_call.1} parent=11 // pred_region
          %s189 = ssub.s32 256, 256
          %190 = vsyncadd [#allocation7], %s189
          %s191 = sshll.u32 [#allocation8], 4
          %s192 = int_to_ptr.vmem [resolvable:$true] %s191
          %197 = dma.hbm_to_vmem [thread:$0]  %s3, 256, %s192, [#allocation7], 64, 64, 4
        $region24: #{tpu_custom_call.1} parent=11 // pred_fallthru
          _
        // Predicated region
        $region25: #{tpu_custom_call.1} parent=11 // pred_check
          %p198 = pneg %p128
        $region26: #{tpu_custom_call.1} parent=11 // pred_check_branch
          %200 = sbr.rel (%p198) target = $region28
        $region27: #{tpu_custom_call.1} parent=11 // pred_region
          _
        $region28: #{tpu_custom_call.1} parent=11 // pred_fallthru
          _
      $region12: #{tpu_custom_call.1} parent=5 // pred_fallthru
        _
      %p201 = scmp.lt.s32.totalorder %s18, 2
      // Predicated region
      $region29: #{tpu_custom_call.1} parent=5 // pred_check
        %p202 = pneg %p201
      $region30: #{tpu_custom_call.1} parent=5 // pred_check_branch
        %204 = sbr.rel (%p202) target = $region32
      $region31: #{tpu_custom_call.1} parent=5 // pred_region
        // Predicated region
        $region33: #{tpu_custom_call.1} parent=31 // pred_check
          %p205 = pneg %p38
        $region34: #{tpu_custom_call.1} parent=31 // pred_check_branch
          %207 = sbr.rel (%p205) target = $region36
        $region35: #{tpu_custom_call.1} parent=31 // pred_region
          %s208 = sand.u32 %s28, 1
          %s209 = scalar_lea.sflag [#allocation4], %s208
          %s210 = sand.u32 %s28, 1
          %s211 = smul.addr %s210, 32
          %s212 = scalar_lea.vmem [#allocation3], %s211
          %s213 = smul.u32 4, %s18
          %s215 = ssub.s32 512, 512
          %216 = vsyncadd %s209, %s215
          %s217 = smul.addr %s213, 128
          %s218 = scalar_lea.hbm %s0, %s217
          %s219 = sshll.u32 %s212, 4
          %s220 = int_to_ptr.vmem [resolvable:$true] %s219
          %225 = dma.hbm_to_vmem [thread:$0]  %s218, 512, %s220, %s209, 128, 128, 8
        $region36: #{tpu_custom_call.1} parent=31 // pred_fallthru
          _
      $region32: #{tpu_custom_call.1} parent=5 // pred_fallthru
        _
      %p226 = scmp.le.s32.totalorder 1, %s18
      %p227 = scmp.lt.s32.totalorder %s18, 3
      %p228 = pnand %p226, %p227
      %p229 = pneg %p228
      // Predicated region
      $region37: #{tpu_custom_call.1} parent=5 // pred_check
        _
      $region38: #{tpu_custom_call.1} parent=5 // pred_check_branch
        %231 = sbr.rel (%p228) target = $region40
      $region39: #{tpu_custom_call.1} parent=5 // pred_region
        %s232 = ssub.s32 %s18, 1
        %s233 = sand.u32 %s31, 1
        %s234 = scalar_lea.sflag [#allocation4], %s233
        %s235 = sand.u32 %s31, 1
        %s236 = smul.addr %s235, 32
        %s237 = scalar_lea.vmem [#allocation3], %s236
        // Predicated region
        $region41: #{tpu_custom_call.1} parent=39 // pred_check
          %p238 = pneg %p44
        $region42: #{tpu_custom_call.1} parent=39 // pred_check_branch
          %240 = sbr.rel (%p238) target = $region44
        $region43: #{tpu_custom_call.1} parent=39 // pred_region
          %241 = dma.done %s234, 512
        $region44: #{tpu_custom_call.1} parent=39 // pred_fallthru
          _
        // Predicated region
        $region45: #{tpu_custom_call.1} parent=39 // pred_check
          %p242 = pneg %p65
        $region46: #{tpu_custom_call.1} parent=39 // pred_check_branch
          %244 = sbr.rel (%p242) target = $region48
        $region47: #{tpu_custom_call.1} parent=39 // pred_region
          %245 = dma.done [#allocation7], 256
        $region48: #{tpu_custom_call.1} parent=39 // pred_fallthru
          _
        // Predicated region
        $region49: #{tpu_custom_call.1} parent=39 // pred_check
          %p246 = pneg %p107
        $region50: #{tpu_custom_call.1} parent=39 // pred_check_branch
          %248 = sbr.rel (%p246) target = $region52
        $region51: #{tpu_custom_call.1} parent=39 // pred_region
          %249 = dma.done [#allocation7], 256
        $region52: #{tpu_custom_call.1} parent=39 // pred_fallthru
          _
        %s250 = sand.u32 %s31, 1
        %s251 = scalar_lea.sflag [#allocation4], %s250
        %s252 = sand.u32 %s31, 1
        %s253 = smul.addr %s252, 32
        %s254 = scalar_lea.vmem [#allocation3], %s253
        %p255 = pneg %p44
        %p256 = pneg %p41
        %p257 = pneg %p65
        %p258 = pneg %p62
        %p259 = pneg %p86
        %p260 = pneg %p83
        %p261 = pneg %p107
        %p262 = pneg %p104
        %p263 = pneg %p128
        %p264 = pneg %p125
        %p265 = pneg %p154
        %p266 = pneg %p151
        %s267 = sand.u32 %s141, 1
        %s268 = scalar_lea.sflag [#allocation5], %s267
        %s269 = sand.u32 %s141, 1
        %s270 = smul.addr %s269, 32
        %s271 = scalar_lea.vmem [#allocation9], %s270
        %s272 = smul.u32 4, %s23
        %s273 = smul.u32 4, %s23
        %v275 = vld [vmem:[%s237] sm:$0xff]
        %v276 = vld [vmem:[%s237 + $0x8] sm:$0xff]
        %v277 = vld [vmem:[%s237 + $0x10] sm:$0xff]
        %v278 = vld [vmem:[%s237 + $0x18] sm:$0xff]
        %v279 = vpack.c.bf16 %v276, %v275
        %v280 = vpack.c.bf16 %v278, %v277
        %v281 = vld [vmem:[#allocation6] sm:$0xf]
        %v282 = vld [vmem:[#allocation6 + $0x4] sm:$0xf]
        %v283 = vld [vmem:[#allocation6 + $0x8] sm:$0xf]
        %v284 = vld [vmem:[#allocation6 + $0xc] sm:$0xf]
        %v285 = vld [vmem:[%s2] sm:$0x1]
        %v287 = vlaneseq
        %v288 = vshrl.u32 %v287, 7
        %v289 = vsub.s32 0, %v288
        %v290 = vrot.slane %v285, %v289
        %v296 = vunpack.c.l.b16 %v281
        %v297 = vunpack.c.l.b16 %v282
        %v298 = vunpack.c.l.b16 %v283
        %v299 = vunpack.c.l.b16 %v284
        %v300 = vpack.c.b16 %v297, %v296
        %v301 = vpack.c.b16 %v299, %v298
        %vm304 = vcmask 261120
        %v306 = vsel %vm304, %v279, 0
        %v309 = vsel %vm304, %v280, 0
        %311 = vmatprep.subr.bf16.mxu0 0
        %312 = vmatpush1.bf16.msra.mxu0 %v300
        %313 = vmatprep.subr.bf16.mxu0 0
        %314 = vmatpush1.bf16.msra.mxu0 %v301
        %315 = vmatprep.subr.bf16.mxu0 0
        %316 = vmatpush1.bf16.msra.mxu0 0
        %317 = vmatprep.subr.bf16.mxu0 0
        %318 = vmatpush1.bf16.msra.mxu0 0
        %319 = vmatprep.subr.bf16.mxu0 0
        %320 = vmatpush1.bf16.msra.mxu0 0
        %321 = vmatprep.subr.bf16.mxu0 0
        %322 = vmatpush1.bf16.msra.mxu0 0
        %323 = vmatprep.subr.bf16.mxu0 0
        %324 = vmatpush1.bf16.msra.mxu0 0
        %325 = vmatprep.subr.bf16.mxu0 0
        %326 = vmatpush1.bf16.msra.mxu0 0
        %327 = vmatprep.subr.bf16.mxu0 0
        %328 = vmatpush1.bf16.msra.mxu0 0
        %329 = vmatprep.subr.bf16.mxu0 0
        %330 = vmatpush1.bf16.msra.mxu0 0
        %331 = vmatprep.subr.bf16.mxu0 0
        %332 = vmatpush1.bf16.msra.mxu0 0
        %333 = vmatprep.subr.bf16.mxu0 0
        %334 = vmatpush1.bf16.msra.mxu0 0
        %335 = vmatprep.subr.bf16.mxu0 0
        %336 = vmatpush1.bf16.msra.mxu0 0
        %337 = vmatprep.subr.bf16.mxu0 0
        %338 = vmatpush1.bf16.msra.mxu0 0
        %339 = vmatprep.subr.bf16.mxu0 0
        %340 = vmatpush1.bf16.msra.mxu0 0
        %341 = vmatprep.subr.bf16.mxu0 0
        %342 = vmatpush1.bf16.msra.mxu0 0
        %343 = vmatprep.mubr.bf16.mxu0 0
        %344 = vmatmul.mubr.bf16.gmra.mrb[0].mxu0 %v306
        %v345 = vpop.f32.mrb[0].mxu0
        %v346 = vadd.f32 %v290, %v345
        %v347 = vpop.f32.mrb[0].mxu0
        %v348 = vpop.f32.mrb[0].mxu0
        %v349 = vadd.f32 %v290, %v348
        %v350 = vpop.f32.mrb[0].mxu0
        %351 = vmatprep.mubr.bf16.mxu0 0
        %352 = vmatmul.mubr.bf16.gmra.mrb[0].mxu0 %v309
        %v353 = vpop.f32.mrb[0].mxu0
        %v354 = vadd.f32 %v290, %v353
        %v355 = vpop.f32.mrb[0].mxu0
        %v356 = vpop.f32.mrb[0].mxu0
        %v357 = vadd.f32 %v290, %v356
        %v358 = vpop.f32.mrb[0].mxu0
        %359 = vdwg.mxu0
        %v360 = vpack.c.bf16 %v346, %v346
        %v361 = vpack.c.bf16 %v349, %v349
        %v362 = vpack.c.bf16 %v354, %v354
        %v363 = vpack.c.bf16 %v357, %v357
        %365 = vrot.lane.b32.xlu0 %v360, 96
        %v366 = vpop.permute.xlu0 %365
        %vm367 = vcmask 64512
        %v369 = vsel %vm367, %v360, 0
        %v372 = vsel %vm367, %v366, 0
        %374 = vmatprep.subr.bf16.mxu0 0
        %375 = vmatpush1.bf16.xpose.msra.mxu0 %v372
        %376 = vmatprep.subr.bf16.mxu0 0
        %377 = vmatpush1.bf16.xpose.msra.mxu0 0
        %378 = vmatprep.subr.bf16.mxu0 0
        %379 = vmatpush1.bf16.xpose.msra.mxu0 0
        %380 = vmatprep.subr.bf16.mxu0 0
        %381 = vmatpush1.bf16.xpose.msra.mxu0 0
        %382 = vmatprep.subr.bf16.mxu0 0
        %383 = vmatpush1.bf16.xpose.msra.mxu0 0
        %384 = vmatprep.subr.bf16.mxu0 0
        %385 = vmatpush1.bf16.xpose.msra.mxu0 0
        %386 = vmatprep.subr.bf16.mxu0 0
        %387 = vmatpush1.bf16.xpose.msra.mxu0 0
        %388 = vmatprep.subr.bf16.mxu0 0
        %389 = vmatpush1.bf16.xpose.msra.mxu0 0
        %390 = vmatprep.subr.bf16.mxu0 0
        %391 = vmatpush1.bf16.xpose.msra.mxu0 0
        %392 = vmatprep.subr.bf16.mxu0 0
        %393 = vmatpush1.bf16.xpose.msra.mxu0 0
        %394 = vmatprep.subr.bf16.mxu0 0
        %395 = vmatpush1.bf16.xpose.msra.mxu0 0
        %396 = vmatprep.subr.bf16.mxu0 0
        %397 = vmatpush1.bf16.xpose.msra.mxu0 0
        %398 = vmatprep.subr.bf16.mxu0 0
        %399 = vmatpush1.bf16.xpose.msra.mxu0 0
        %400 = vmatprep.subr.bf16.mxu0 0
        %401 = vmatpush1.bf16.xpose.msra.mxu0 0
        %402 = vmatprep.subr.bf16.mxu0 0
        %403 = vmatpush1.bf16.xpose.msra.mxu0 0
        %404 = vmatprep.subr.bf16.mxu0 0
        %405 = vmatpush1.bf16.xpose.msra.mxu0 0
        %406 = vmatprep.mubr.bf16.mxu0 0
        %407 = vmatmul.mubr.bf16.gmra.mrb[0].mxu0 %v369
        %v408 = vpop.f32.mrb[0].mxu0
        %v409 = vadd.f32 0.0, %v408
        %v410 = vpop.f32.mrb[0].mxu0
        %v411 = vpop.f32.mrb[0].mxu0
        %v412 = vpop.f32.mrb[0].mxu0
        %413 = vdwg.mxu0
        %415 = vrot.lane.b32.xlu0 %v361, 96
        %v416 = vpop.permute.xlu0 %415
        %v418 = vsel %vm367, %v361, 0
        %v421 = vsel %vm367, %v416, 0
        %423 = vmatprep.subr.bf16.mxu0 0
        %424 = vmatpush1.bf16.xpose.msra.mxu0 %v421
        %425 = vmatprep.subr.bf16.mxu0 0
        %426 = vmatpush1.bf16.xpose.msra.mxu0 0
        %427 = vmatprep.subr.bf16.mxu0 0
        %428 = vmatpush1.bf16.xpose.msra.mxu0 0
        %429 = vmatprep.subr.bf16.mxu0 0
        %430 = vmatpush1.bf16.xpose.msra.mxu0 0
        %431 = vmatprep.subr.bf16.mxu0 0
        %432 = vmatpush1.bf16.xpose.msra.mxu0 0
        %433 = vmatprep.subr.bf16.mxu0 0
        %434 = vmatpush1.bf16.xpose.msra.mxu0 0
        %435 = vmatprep.subr.bf16.mxu0 0
        %436 = vmatpush1.bf16.xpose.msra.mxu0 0
        %437 = vmatprep.subr.bf16.mxu0 0
        %438 = vmatpush1.bf16.xpose.msra.mxu0 0
        %439 = vmatprep.subr.bf16.mxu0 0
        %440 = vmatpush1.bf16.xpose.msra.mxu0 0
        %441 = vmatprep.subr.bf16.mxu0 0
        %442 = vmatpush1.bf16.xpose.msra.mxu0 0
        %443 = vmatprep.subr.bf16.mxu0 0
        %444 = vmatpush1.bf16.xpose.msra.mxu0 0
        %445 = vmatprep.subr.bf16.mxu0 0
        %446 = vmatpush1.bf16.xpose.msra.mxu0 0
        %447 = vmatprep.subr.bf16.mxu0 0
        %448 = vmatpush1.bf16.xpose.msra.mxu0 0
        %449 = vmatprep.subr.bf16.mxu0 0
        %450 = vmatpush1.bf16.xpose.msra.mxu0 0
        %451 = vmatprep.subr.bf16.mxu0 0
        %452 = vmatpush1.bf16.xpose.msra.mxu0 0
        %453 = vmatprep.subr.bf16.mxu0 0
        %454 = vmatpush1.bf16.xpose.msra.mxu0 0
        %455 = vmatprep.mubr.bf16.mxu0 0
        %456 = vmatmul.mubr.bf16.gmra.mrb[0].mxu0 %v418
        %v457 = vpop.f32.mrb[0].mxu0
        %v458 = vadd.f32 0.0, %v457
        %v459 = vpop.f32.mrb[0].mxu0
        %v460 = vpop.f32.mrb[0].mxu0
        %v461 = vpop.f32.mrb[0].mxu0
        %462 = vdwg.mxu0
        %464 = vrot.lane.b32.xlu0 %v362, 96
        %v465 = vpop.permute.xlu0 %464
        %v467 = vsel %vm367, %v362, 0
        %v470 = vsel %vm367, %v465, 0
        %472 = vmatprep.subr.bf16.mxu0 0
        %473 = vmatpush1.bf16.xpose.msra.mxu0 %v470
        %474 = vmatprep.subr.bf16.mxu0 0
        %475 = vmatpush1.bf16.xpose.msra.mxu0 0
        %476 = vmatprep.subr.bf16.mxu0 0
        %477 = vmatpush1.bf16.xpose.msra.mxu0 0
        %478 = vmatprep.subr.bf16.mxu0 0
        %479 = vmatpush1.bf16.xpose.msra.mxu0 0
        %480 = vmatprep.subr.bf16.mxu0 0
        %481 = vmatpush1.bf16.xpose.msra.mxu0 0
        %482 = vmatprep.subr.bf16.mxu0 0
        %483 = vmatpush1.bf16.xpose.msra.mxu0 0
        %484 = vmatprep.subr.bf16.mxu0 0
        %485 = vmatpush1.bf16.xpose.msra.mxu0 0
        %486 = vmatprep.subr.bf16.mxu0 0
        %487 = vmatpush1.bf16.xpose.msra.mxu0 0
        %488 = vmatprep.subr.bf16.mxu0 0
        %489 = vmatpush1.bf16.xpose.msra.mxu0 0
        %490 = vmatprep.subr.bf16.mxu0 0
        %491 = vmatpush1.bf16.xpose.msra.mxu0 0
        %492 = vmatprep.subr.bf16.mxu0 0
        %493 = vmatpush1.bf16.xpose.msra.mxu0 0
        %494 = vmatprep.subr.bf16.mxu0 0
        %495 = vmatpush1.bf16.xpose.msra.mxu0 0
        %496 = vmatprep.subr.bf16.mxu0 0
        %497 = vmatpush1.bf16.xpose.msra.mxu0 0
        %498 = vmatprep.subr.bf16.mxu0 0
        %499 = vmatpush1.bf16.xpose.msra.mxu0 0
        %500 = vmatprep.subr.bf16.mxu0 0
        %501 = vmatpush1.bf16.xpose.msra.mxu0 0
        %502 = vmatprep.subr.bf16.mxu0 0
        %503 = vmatpush1.bf16.xpose.msra.mxu0 0
        %504 = vmatprep.mubr.bf16.mxu0 0
        %505 = vmatmul.mubr.bf16.gmra.mrb[0].mxu0 %v467
        %v506 = vpop.f32.mrb[0].mxu0
        %v507 = vadd.f32 0.0, %v506
        %v508 = vpop.f32.mrb[0].mxu0
        %v509 = vpop.f32.mrb[0].mxu0
        %v510 = vpop.f32.mrb[0].mxu0
        %511 = vdwg.mxu0
        %513 = vrot.lane.b32.xlu0 %v363, 96
        %v514 = vpop.permute.xlu0 %513
        %v516 = vsel %vm367, %v363, 0
        %v519 = vsel %vm367, %v514, 0
        %521 = vmatprep.subr.bf16.mxu0 0
        %522 = vmatpush1.bf16.xpose.msra.mxu0 %v519
        %523 = vmatprep.subr.bf16.mxu0 0
        %524 = vmatpush1.bf16.xpose.msra.mxu0 0
        %525 = vmatprep.subr.bf16.mxu0 0
        %526 = vmatpush1.bf16.xpose.msra.mxu0 0
        %527 = vmatprep.subr.bf16.mxu0 0
        %528 = vmatpush1.bf16.xpose.msra.mxu0 0
        %529 = vmatprep.subr.bf16.mxu0 0
        %530 = vmatpush1.bf16.xpose.msra.mxu0 0
        %531 = vmatprep.subr.bf16.mxu0 0
        %532 = vmatpush1.bf16.xpose.msra.mxu0 0
        %533 = vmatprep.subr.bf16.mxu0 0
        %534 = vmatpush1.bf16.xpose.msra.mxu0 0
        %535 = vmatprep.subr.bf16.mxu0 0
        %536 = vmatpush1.bf16.xpose.msra.mxu0 0
        %537 = vmatprep.subr.bf16.mxu0 0
        %538 = vmatpush1.bf16.xpose.msra.mxu0 0
        %539 = vmatprep.subr.bf16.mxu0 0
        %540 = vmatpush1.bf16.xpose.msra.mxu0 0
        %541 = vmatprep.subr.bf16.mxu0 0
        %542 = vmatpush1.bf16.xpose.msra.mxu0 0
        %543 = vmatprep.subr.bf16.mxu0 0
        %544 = vmatpush1.bf16.xpose.msra.mxu0 0
        %545 = vmatprep.subr.bf16.mxu0 0
        %546 = vmatpush1.bf16.xpose.msra.mxu0 0
        %547 = vmatprep.subr.bf16.mxu0 0
        %548 = vmatpush1.bf16.xpose.msra.mxu0 0
        %549 = vmatprep.subr.bf16.mxu0 0
        %550 = vmatpush1.bf16.xpose.msra.mxu0 0
        %551 = vmatprep.subr.bf16.mxu0 0
        %552 = vmatpush1.bf16.xpose.msra.mxu0 0
        %553 = vmatprep.mubr.bf16.mxu0 0
        %554 = vmatmul.mubr.bf16.gmra.mrb[0].mxu0 %v516
        %v555 = vpop.f32.mrb[0].mxu0
        %v556 = vadd.f32 0.0, %v555
        %v557 = vpop.f32.mrb[0].mxu0
        %v558 = vpop.f32.mrb[0].mxu0
        %v559 = vpop.f32.mrb[0].mxu0
        %560 = vdwg.mxu0
        %v561 = vsel %vm367, %v409, -inf
        %562 = vmax.xlane.f32.xlu0 %v561
        %v563 = vpop.xlane.xlu0 %562
        %v564 = vsel %vm367, %v458, -inf
        %565 = vmax.xlane.f32.xlu0 %v564
        %v566 = vpop.xlane.xlu0 %565
        %v567 = vsel %vm367, %v507, -inf
        %568 = vmax.xlane.f32.xlu0 %v567
        %v569 = vpop.xlane.xlu0 %568
        %v570 = vsel %vm367, %v556, -inf
        %571 = vmax.xlane.f32.xlu0 %v570
        %v572 = vpop.xlane.xlu0 %571
        %v573 = vsub.f32 %v409, %v563
        %v574 = vsub.f32 %v458, %v566
        %v575 = vsub.f32 %v507, %v569
        %v576 = vsub.f32 %v556, %v572
        %v577 = vmul.f32 %v573, 1.442695
        %v578 = vpow.pop %v577
        %v579 = vmul.f32 %v574, 1.442695
        %v580 = vpow.pop %v579
        %v581 = vmul.f32 %v575, 1.442695
        %v582 = vpow.pop %v581
        %v583 = vmul.f32 %v576, 1.442695
        %v584 = vpow.pop %v583
        %v585 = vsel %vm367, %v578, 0.0
        %586 = vadd.xlane.f32.xlu0 %v585
        %v587 = vpop.xlane.xlu0 %586
        %v588 = vsel %vm367, %v580, 0.0
        %589 = vadd.xlane.f32.xlu0 %v588
        %v590 = vpop.xlane.xlu0 %589
        %v591 = vsel %vm367, %v582, 0.0
        %592 = vadd.xlane.f32.xlu0 %v591
        %v593 = vpop.xlane.xlu0 %592
        %v594 = vsel %vm367, %v584, 0.0
        %595 = vadd.xlane.f32.xlu0 %v594
        %v596 = vpop.xlane.xlu0 %595
        %v597 = vpack.c.bf16 %v578, %v578
        %v598 = vpack.c.bf16 %v580, %v580
        %v599 = vpack.c.bf16 %v582, %v582
        %v600 = vpack.c.bf16 %v584, %v584
        %601 = vrot.lane.b32.xlu0 %v360, 64
        %v602 = vpop.permute.xlu0 %601
        %v604 = vsel %vm367, %v597, 0
        %vm606 = vcmask 1043456
        %v608 = vsel %vm606, %v602, 0
        %610 = vmatprep.subr.bf16.mxu0 0
        %611 = vmatpush1.bf16.msra.mxu0 %v608
        %612 = vmatprep.subr.bf16.mxu0 0
        %613 = vmatpush1.bf16.msra.mxu0 0
        %614 = vmatprep.subr.bf16.mxu0 0
        %615 = vmatpush1.bf16.msra.mxu0 0
        %616 = vmatprep.subr.bf16.mxu0 0
        %617 = vmatpush1.bf16.msra.mxu0 0
        %618 = vmatprep.subr.bf16.mxu0 0
        %619 = vmatpush1.bf16.msra.mxu0 0
        %620 = vmatprep.subr.bf16.mxu0 0
        %621 = vmatpush1.bf16.msra.mxu0 0
        %622 = vmatprep.subr.bf16.mxu0 0
        %623 = vmatpush1.bf16.msra.mxu0 0
        %624 = vmatprep.subr.bf16.mxu0 0
        %625 = vmatpush1.bf16.msra.mxu0 0
        %626 = vmatprep.subr.bf16.mxu0 0
        %627 = vmatpush1.bf16.msra.mxu0 0
        %628 = vmatprep.subr.bf16.mxu0 0
        %629 = vmatpush1.bf16.msra.mxu0 0
        %630 = vmatprep.subr.bf16.mxu0 0
        %631 = vmatpush1.bf16.msra.mxu0 0
        %632 = vmatprep.subr.bf16.mxu0 0
        %633 = vmatpush1.bf16.msra.mxu0 0
        %634 = vmatprep.subr.bf16.mxu0 0
        %635 = vmatpush1.bf16.msra.mxu0 0
        %636 = vmatprep.subr.bf16.mxu0 0
        %637 = vmatpush1.bf16.msra.mxu0 0
        %638 = vmatprep.subr.bf16.mxu0 0
        %639 = vmatpush1.bf16.msra.mxu0 0
        %640 = vmatprep.subr.bf16.mxu0 0
        %641 = vmatpush1.bf16.msra.mxu0 0
        %642 = vmatprep.mubr.bf16.mxu0 0
        %643 = vmatmul.mubr.bf16.gmra.mrb[0].mxu0 %v604
        %v644 = vpop.f32.mrb[0].mxu0
        %v645 = vadd.f32 0.0, %v644
        %v646 = vpop.f32.mrb[0].mxu0
        %v647 = vpop.f32.mrb[0].mxu0
        %v648 = vpop.f32.mrb[0].mxu0
        %649 = vdwg.mxu0
        %650 = vrot.lane.b32.xlu0 %v361, 64
        %v651 = vpop.permute.xlu0 %650
        %v653 = vsel %vm367, %v598, 0
        %v656 = vsel %vm606, %v651, 0
        %658 = vmatprep.subr.bf16.mxu0 0
        %659 = vmatpush1.bf16.msra.mxu0 %v656
        %660 = vmatprep.subr.bf16.mxu0 0
        %661 = vmatpush1.bf16.msra.mxu0 0
        %662 = vmatprep.subr.bf16.mxu0 0
        %663 = vmatpush1.bf16.msra.mxu0 0
        %664 = vmatprep.subr.bf16.mxu0 0
        %665 = vmatpush1.bf16.msra.mxu0 0
        %666 = vmatprep.subr.bf16.mxu0 0
        %667 = vmatpush1.bf16.msra.mxu0 0
        %668 = vmatprep.subr.bf16.mxu0 0
        %669 = vmatpush1.bf16.msra.mxu0 0
        %670 = vmatprep.subr.bf16.mxu0 0
        %671 = vmatpush1.bf16.msra.mxu0 0
        %672 = vmatprep.subr.bf16.mxu0 0
        %673 = vmatpush1.bf16.msra.mxu0 0
        %674 = vmatprep.subr.bf16.mxu0 0
        %675 = vmatpush1.bf16.msra.mxu0 0
        %676 = vmatprep.subr.bf16.mxu0 0
        %677 = vmatpush1.bf16.msra.mxu0 0
        %678 = vmatprep.subr.bf16.mxu0 0
        %679 = vmatpush1.bf16.msra.mxu0 0
        %680 = vmatprep.subr.bf16.mxu0 0
        %681 = vmatpush1.bf16.msra.mxu0 0
        %682 = vmatprep.subr.bf16.mxu0 0
        %683 = vmatpush1.bf16.msra.mxu0 0
        %684 = vmatprep.subr.bf16.mxu0 0
        %685 = vmatpush1.bf16.msra.mxu0 0
        %686 = vmatprep.subr.bf16.mxu0 0
        %687 = vmatpush1.bf16.msra.mxu0 0
        %688 = vmatprep.subr.bf16.mxu0 0
        %689 = vmatpush1.bf16.msra.mxu0 0
        %690 = vmatprep.mubr.bf16.mxu0 0
        %691 = vmatmul.mubr.bf16.gmra.mrb[0].mxu0 %v653
        %v692 = vpop.f32.mrb[0].mxu0
        %v693 = vadd.f32 0.0, %v692
        %v694 = vpop.f32.mrb[0].mxu0
        %v695 = vpop.f32.mrb[0].mxu0
        %v696 = vpop.f32.mrb[0].mxu0
        %697 = vdwg.mxu0
        %698 = vrot.lane.b32.xlu0 %v362, 64
        %v699 = vpop.permute.xlu0 %698
        %v701 = vsel %vm367, %v599, 0
        %v704 = vsel %vm606, %v699, 0
        %706 = vmatprep.subr.bf16.mxu0 0
        %707 = vmatpush1.bf16.msra.mxu0 %v704
        %708 = vmatprep.subr.bf16.mxu0 0
        %709 = vmatpush1.bf16.msra.mxu0 0
        %710 = vmatprep.subr.bf16.mxu0 0
        %711 = vmatpush1.bf16.msra.mxu0 0
        %712 = vmatprep.subr.bf16.mxu0 0
        %713 = vmatpush1.bf16.msra.mxu0 0
        %714 = vmatprep.subr.bf16.mxu0 0
        %715 = vmatpush1.bf16.msra.mxu0 0
        %716 = vmatprep.subr.bf16.mxu0 0
        %717 = vmatpush1.bf16.msra.mxu0 0
        %718 = vmatprep.subr.bf16.mxu0 0
        %719 = vmatpush1.bf16.msra.mxu0 0
        %720 = vmatprep.subr.bf16.mxu0 0
        %721 = vmatpush1.bf16.msra.mxu0 0
        %722 = vmatprep.subr.bf16.mxu0 0
        %723 = vmatpush1.bf16.msra.mxu0 0
        %724 = vmatprep.subr.bf16.mxu0 0
        %725 = vmatpush1.bf16.msra.mxu0 0
        %726 = vmatprep.subr.bf16.mxu0 0
        %727 = vmatpush1.bf16.msra.mxu0 0
        %728 = vmatprep.subr.bf16.mxu0 0
        %729 = vmatpush1.bf16.msra.mxu0 0
        %730 = vmatprep.subr.bf16.mxu0 0
        %731 = vmatpush1.bf16.msra.mxu0 0
        %732 = vmatprep.subr.bf16.mxu0 0
        %733 = vmatpush1.bf16.msra.mxu0 0
        %734 = vmatprep.subr.bf16.mxu0 0
        %735 = vmatpush1.bf16.msra.mxu0 0
        %736 = vmatprep.subr.bf16.mxu0 0
        %737 = vmatpush1.bf16.msra.mxu0 0
        %738 = vmatprep.mubr.bf16.mxu0 0
        %739 = vmatmul.mubr.bf16.gmra.mrb[0].mxu0 %v701
        %v740 = vpop.f32.mrb[0].mxu0
        %v741 = vadd.f32 0.0, %v740
        %v742 = vpop.f32.mrb[0].mxu0
        %v743 = vpop.f32.mrb[0].mxu0
        %v744 = vpop.f32.mrb[0].mxu0
        %745 = vdwg.mxu0
        %746 = vrot.lane.b32.xlu0 %v363, 64
        %v747 = vpop.permute.xlu0 %746
        %v749 = vsel %vm367, %v600, 0
        %v752 = vsel %vm606, %v747, 0
        %754 = vmatprep.subr.bf16.mxu0 0
        %755 = vmatpush1.bf16.msra.mxu0 %v752
        %756 = vmatprep.subr.bf16.mxu0 0
        %757 = vmatpush1.bf16.msra.mxu0 0
        %758 = vmatprep.subr.bf16.mxu0 0
        %759 = vmatpush1.bf16.msra.mxu0 0
        %760 = vmatprep.subr.bf16.mxu0 0
        %761 = vmatpush1.bf16.msra.mxu0 0
        %762 = vmatprep.subr.bf16.mxu0 0
        %763 = vmatpush1.bf16.msra.mxu0 0
        %764 = vmatprep.subr.bf16.mxu0 0
        %765 = vmatpush1.bf16.msra.mxu0 0
        %766 = vmatprep.subr.bf16.mxu0 0
        %767 = vmatpush1.bf16.msra.mxu0 0
        %768 = vmatprep.subr.bf16.mxu0 0
        %769 = vmatpush1.bf16.msra.mxu0 0
        %770 = vmatprep.subr.bf16.mxu0 0
        %771 = vmatpush1.bf16.msra.mxu0 0
        %772 = vmatprep.subr.bf16.mxu0 0
        %773 = vmatpush1.bf16.msra.mxu0 0
        %774 = vmatprep.subr.bf16.mxu0 0
        %775 = vmatpush1.bf16.msra.mxu0 0
        %776 = vmatprep.subr.bf16.mxu0 0
        %777 = vmatpush1.bf16.msra.mxu0 0
        %778 = vmatprep.subr.bf16.mxu0 0
        %779 = vmatpush1.bf16.msra.mxu0 0
        %780 = vmatprep.subr.bf16.mxu0 0
        %781 = vmatpush1.bf16.msra.mxu0 0
        %782 = vmatprep.subr.bf16.mxu0 0
        %783 = vmatpush1.bf16.msra.mxu0 0
        %784 = vmatprep.subr.bf16.mxu0 0
        %785 = vmatpush1.bf16.msra.mxu0 0
        %786 = vmatprep.mubr.bf16.mxu0 0
        %787 = vmatmul.mubr.bf16.gmra.mrb[0].mxu0 %v749
        %v788 = vpop.f32.mrb[0].mxu0
        %v789 = vadd.f32 0.0, %v788
        %v790 = vpop.f32.mrb[0].mxu0
        %v791 = vpop.f32.mrb[0].mxu0
        %v792 = vpop.f32.mrb[0].mxu0
        %793 = vdwg.mxu0
        %v794 = vrcp.pop %v587
        %v795 = vrcp.pop %v590
        %v796 = vrcp.pop %v593
        %v797 = vrcp.pop %v596
        %v798 = vmul.f32 %v645, %v794
        %v799 = vmul.f32 %v693, %v795
        %v800 = vmul.f32 %v741, %v796
        %v801 = vmul.f32 %v789, %v797
        %802 = vst.msk [vmem:[#allocation2] sm:$0xff] %vm367, %v798
        %803 = vst.msk [vmem:[#allocation2 + $0x8] sm:$0xff] %vm367, %v799
        %804 = vst.msk [vmem:[#allocation2 + $0x10] sm:$0xff] %vm367, %v800
        %805 = vst.msk [vmem:[#allocation2 + $0x18] sm:$0xff] %vm367, %v801
        %806 = vrot.lane.b32.xlu0 %v360, 120
        %v807 = vpop.permute.xlu0 %806
        %808 = vrot.lane.b32.xlu0 %v360, 88
        %v809 = vpop.permute.xlu0 %808
        %v811 = vsel %vm367, %v807, 0
        %v814 = vsel %vm367, %v809, 0
        %816 = vmatprep.subr.bf16.mxu0 0
        %817 = vmatpush1.bf16.xpose.msra.mxu0 %v814
        %818 = vmatprep.subr.bf16.mxu0 0
        %819 = vmatpush1.bf16.xpose.msra.mxu0 0
        %820 = vmatprep.subr.bf16.mxu0 0
        %821 = vmatpush1.bf16.xpose.msra.mxu0 0
        %822 = vmatprep.subr.bf16.mxu0 0
        %823 = vmatpush1.bf16.xpose.msra.mxu0 0
        %824 = vmatprep.subr.bf16.mxu0 0
        %825 = vmatpush1.bf16.xpose.msra.mxu0 0
        %826 = vmatprep.subr.bf16.mxu0 0
        %827 = vmatpush1.bf16.xpose.msra.mxu0 0
        %828 = vmatprep.subr.bf16.mxu0 0
        %829 = vmatpush1.bf16.xpose.msra.mxu0 0
        %830 = vmatprep.subr.bf16.mxu0 0
        %831 = vmatpush1.bf16.xpose.msra.mxu0 0
        %832 = vmatprep.subr.bf16.mxu0 0
        %833 = vmatpush1.bf16.xpose.msra.mxu0 0
        %834 = vmatprep.subr.bf16.mxu0 0
        %835 = vmatpush1.bf16.xpose.msra.mxu0 0
        %836 = vmatprep.subr.bf16.mxu0 0
        %837 = vmatpush1.bf16.xpose.msra.mxu0 0
        %838 = vmatprep.subr.bf16.mxu0 0
        %839 = vmatpush1.bf16.xpose.msra.mxu0 0
        %840 = vmatprep.subr.bf16.mxu0 0
        %841 = vmatpush1.bf16.xpose.msra.mxu0 0
        %842 = vmatprep.subr.bf16.mxu0 0
        %843 = vmatpush1.bf16.xpose.msra.mxu0 0
        %844 = vmatprep.subr.bf16.mxu0 0
        %845 = vmatpush1.bf16.xpose.msra.mxu0 0
        %846 = vmatprep.subr.bf16.mxu0 0
        %847 = vmatpush1.bf16.xpose.msra.mxu0 0
        %848 = vmatprep.mubr.bf16.mxu0 0
        %849 = vmatmul.mubr.bf16.gmra.mrb[0].mxu0 %v811
        %v850 = vpop.f32.mrb[0].mxu0
        %v851 = vadd.f32 0.0, %v850
        %v852 = vpop.f32.mrb[0].mxu0
        %v853 = vpop.f32.mrb[0].mxu0
        %v854 = vpop.f32.mrb[0].mxu0
        %855 = vdwg.mxu0
        %856 = vrot.lane.b32.xlu0 %v361, 120
        %v857 = vpop.permute.xlu0 %856
        %858 = vrot.lane.b32.xlu0 %v361, 88
        %v859 = vpop.permute.xlu0 %858
        %v861 = vsel %vm367, %v857, 0
        %v864 = vsel %vm367, %v859, 0
        %866 = vmatprep.subr.bf16.mxu0 0
        %867 = vmatpush1.bf16.xpose.msra.mxu0 %v864
        %868 = vmatprep.subr.bf16.mxu0 0
        %869 = vmatpush1.bf16.xpose.msra.mxu0 0
        %870 = vmatprep.subr.bf16.mxu0 0
        %871 = vmatpush1.bf16.xpose.msra.mxu0 0
        %872 = vmatprep.subr.bf16.mxu0 0
        %873 = vmatpush1.bf16.xpose.msra.mxu0 0
        %874 = vmatprep.subr.bf16.mxu0 0
        %875 = vmatpush1.bf16.xpose.msra.mxu0 0
        %876 = vmatprep.subr.bf16.mxu0 0
        %877 = vmatpush1.bf16.xpose.msra.mxu0 0
        %878 = vmatprep.subr.bf16.mxu0 0
        %879 = vmatpush1.bf16.xpose.msra.mxu0 0
        %880 = vmatprep.subr.bf16.mxu0 0
        %881 = vmatpush1.bf16.xpose.msra.mxu0 0
        %882 = vmatprep.subr.bf16.mxu0 0
        %883 = vmatpush1.bf16.xpose.msra.mxu0 0
        %884 = vmatprep.subr.bf16.mxu0 0
        %885 = vmatpush1.bf16.xpose.msra.mxu0 0
        %886 = vmatprep.subr.bf16.mxu0 0
        %887 = vmatpush1.bf16.xpose.msra.mxu0 0
        %888 = vmatprep.subr.bf16.mxu0 0
        %889 = vmatpush1.bf16.xpose.msra.mxu0 0
        %890 = vmatprep.subr.bf16.mxu0 0
        %891 = vmatpush1.bf16.xpose.msra.mxu0 0
        %892 = vmatprep.subr.bf16.mxu0 0
        %893 = vmatpush1.bf16.xpose.msra.mxu0 0
        %894 = vmatprep.subr.bf16.mxu0 0
        %895 = vmatpush1.bf16.xpose.msra.mxu0 0
        %896 = vmatprep.subr.bf16.mxu0 0
        %897 = vmatpush1.bf16.xpose.msra.mxu0 0
        %898 = vmatprep.mubr.bf16.mxu0 0
        %899 = vmatmul.mubr.bf16.gmra.mrb[0].mxu0 %v861
        %v900 = vpop.f32.mrb[0].mxu0
        %v901 = vadd.f32 0.0, %v900
        %v902 = vpop.f32.mrb[0].mxu0
        %v903 = vpop.f32.mrb[0].mxu0
        %v904 = vpop.f32.mrb[0].mxu0
        %905 = vdwg.mxu0
        %906 = vrot.lane.b32.xlu0 %v362, 120
        %v907 = vpop.permute.xlu0 %906
        %908 = vrot.lane.b32.xlu0 %v362, 88
        %v909 = vpop.permute.xlu0 %908
        %v911 = vsel %vm367, %v907, 0
        %v914 = vsel %vm367, %v909, 0
        %916 = vmatprep.subr.bf16.mxu0 0
        %917 = vmatpush1.bf16.xpose.msra.mxu0 %v914
        %918 = vmatprep.subr.bf16.mxu0 0
        %919 = vmatpush1.bf16.xpose.msra.mxu0 0
        %920 = vmatprep.subr.bf16.mxu0 0
        %921 = vmatpush1.bf16.xpose.msra.mxu0 0
        %922 = vmatprep.subr.bf16.mxu0 0
        %923 = vmatpush1.bf16.xpose.msra.mxu0 0
        %924 = vmatprep.subr.bf16.mxu0 0
        %925 = vmatpush1.bf16.xpose.msra.mxu0 0
        %926 = vmatprep.subr.bf16.mxu0 0
        %927 = vmatpush1.bf16.xpose.msra.mxu0 0
        %928 = vmatprep.subr.bf16.mxu0 0
        %929 = vmatpush1.bf16.xpose.msra.mxu0 0
        %930 = vmatprep.subr.bf16.mxu0 0
        %931 = vmatpush1.bf16.xpose.msra.mxu0 0
        %932 = vmatprep.subr.bf16.mxu0 0
        %933 = vmatpush1.bf16.xpose.msra.mxu0 0
        %934 = vmatprep.subr.bf16.mxu0 0
        %935 = vmatpush1.bf16.xpose.msra.mxu0 0
        %936 = vmatprep.subr.bf16.mxu0 0
        %937 = vmatpush1.bf16.xpose.msra.mxu0 0
        %938 = vmatprep.subr.bf16.mxu0 0
        %939 = vmatpush1.bf16.xpose.msra.mxu0 0
        %940 = vmatprep.subr.bf16.mxu0 0
        %941 = vmatpush1.bf16.xpose.msra.mxu0 0
        %942 = vmatprep.subr.bf16.mxu0 0
        %943 = vmatpush1.bf16.xpose.msra.mxu0 0
        %944 = vmatprep.subr.bf16.mxu0 0
        %945 = vmatpush1.bf16.xpose.msra.mxu0 0
        %946 = vmatprep.subr.bf16.mxu0 0
        %947 = vmatpush1.bf16.xpose.msra.mxu0 0
        %948 = vmatprep.mubr.bf16.mxu0 0
        %949 = vmatmul.mubr.bf16.gmra.mrb[0].mxu0 %v911
        %v950 = vpop.f32.mrb[0].mxu0
        %v951 = vadd.f32 0.0, %v950
        %v952 = vpop.f32.mrb[0].mxu0
        %v953 = vpop.f32.mrb[0].mxu0
        %v954 = vpop.f32.mrb[0].mxu0
        %955 = vdwg.mxu0
        %956 = vrot.lane.b32.xlu0 %v363, 120
        %v957 = vpop.permute.xlu0 %956
        %958 = vrot.lane.b32.xlu0 %v363, 88
        %v959 = vpop.permute.xlu0 %958
        %v961 = vsel %vm367, %v957, 0
        %v964 = vsel %vm367, %v959, 0
        %966 = vmatprep.subr.bf16.mxu0 0
        %967 = vmatpush1.bf16.xpose.msra.mxu0 %v964
        %968 = vmatprep.subr.bf16.mxu0 0
        %969 = vmatpush1.bf16.xpose.msra.mxu0 0
        %970 = vmatprep.subr.bf16.mxu0 0
        %971 = vmatpush1.bf16.xpose.msra.mxu0 0
        %972 = vmatprep.subr.bf16.mxu0 0
        %973 = vmatpush1.bf16.xpose.msra.mxu0 0
        %974 = vmatprep.subr.bf16.mxu0 0
        %975 = vmatpush1.bf16.xpose.msra.mxu0 0
        %976 = vmatprep.subr.bf16.mxu0 0
        %977 = vmatpush1.bf16.xpose.msra.mxu0 0
        %978 = vmatprep.subr.bf16.mxu0 0
        %979 = vmatpush1.bf16.xpose.msra.mxu0 0
        %980 = vmatprep.subr.bf16.mxu0 0
        %981 = vmatpush1.bf16.xpose.msra.mxu0 0
        %982 = vmatprep.subr.bf16.mxu0 0
        %983 = vmatpush1.bf16.xpose.msra.mxu0 0
        %984 = vmatprep.subr.bf16.mxu0 0
        %985 = vmatpush1.bf16.xpose.msra.mxu0 0
        %986 = vmatprep.subr.bf16.mxu0 0
        %987 = vmatpush1.bf16.xpose.msra.mxu0 0
        %988 = vmatprep.subr.bf16.mxu0 0
        %989 = vmatpush1.bf16.xpose.msra.mxu0 0
        %990 = vmatprep.subr.bf16.mxu0 0
        %991 = vmatpush1.bf16.xpose.msra.mxu0 0
        %992 = vmatprep.subr.bf16.mxu0 0
        %993 = vmatpush1.bf16.xpose.msra.mxu0 0
        %994 = vmatprep.subr.bf16.mxu0 0
        %995 = vmatpush1.bf16.xpose.msra.mxu0 0
        %996 = vmatprep.subr.bf16.mxu0 0
        %997 = vmatpush1.bf16.xpose.msra.mxu0 0
        %998 = vmatprep.mubr.bf16.mxu0 0
        %999 = vmatmul.mubr.bf16.gmra.mrb[0].mxu0 %v961
        %v1000 = vpop.f32.mrb[0].mxu0
        %v1001 = vadd.f32 0.0, %v1000
        %v1002 = vpop.f32.mrb[0].mxu0
        %v1003 = vpop.f32.mrb[0].mxu0
        %v1004 = vpop.f32.mrb[0].mxu0
        %1005 = vdwg.mxu0
        %v1006 = vsel %vm367, %v851, -inf
        %1007 = vmax.xlane.f32.xlu0 %v1006
        %v1008 = vpop.xlane.xlu0 %1007
        %v1009 = vsel %vm367, %v901, -inf
        %1010 = vmax.xlane.f32.xlu0 %v1009
        %v1011 = vpop.xlane.xlu0 %1010
        %v1012 = vsel %vm367, %v951, -inf
        %1013 = vmax.xlane.f32.xlu0 %v1012
        %v1014 = vpop.xlane.xlu0 %1013
        %v1015 = vsel %vm367, %v1001, -inf
        %1016 = vmax.xlane.f32.xlu0 %v1015
        %v1017 = vpop.xlane.xlu0 %1016
        %v1018 = vsub.f32 %v851, %v1008
        %v1019 = vsub.f32 %v901, %v1011
        %v1020 = vsub.f32 %v951, %v1014
        %v1021 = vsub.f32 %v1001, %v1017
        %v1022 = vmul.f32 %v1018, 1.442695
        %v1023 = vpow.pop %v1022
        %v1024 = vmul.f32 %v1019, 1.442695
        %v1025 = vpow.pop %v1024
        %v1026 = vmul.f32 %v1020, 1.442695
        %v1027 = vpow.pop %v1026
        %v1028 = vmul.f32 %v1021, 1.442695
        %v1029 = vpow.pop %v1028
        %v1030 = vsel %vm367, %v1023, 0.0
        %1031 = vadd.xlane.f32.xlu0 %v1030
        %v1032 = vpop.xlane.xlu0 %1031
        %v1033 = vsel %vm367, %v1025, 0.0
        %1034 = vadd.xlane.f32.xlu0 %v1033
        %v1035 = vpop.xlane.xlu0 %1034
        %v1036 = vsel %vm367, %v1027, 0.0
        %1037 = vadd.xlane.f32.xlu0 %v1036
        %v1038 = vpop.xlane.xlu0 %1037
        %v1039 = vsel %vm367, %v1029, 0.0
        %1040 = vadd.xlane.f32.xlu0 %v1039
        %v1041 = vpop.xlane.xlu0 %1040
        %v1042 = vpack.c.bf16 %v1023, %v1023
        %v1043 = vpack.c.bf16 %v1025, %v1025
        %v1044 = vpack.c.bf16 %v1027, %v1027
        %v1045 = vpack.c.bf16 %v1029, %v1029
        %1046 = vrot.lane.b32.xlu0 %v360, 56
        %v1047 = vpop.permute.xlu0 %1046
        %v1049 = vsel %vm367, %v1042, 0
        %v1052 = vsel %vm606, %v1047, 0
        %1054 = vmatprep.subr.bf16.mxu0 0
        %1055 = vmatpush1.bf16.msra.mxu0 %v1052
        %1056 = vmatprep.subr.bf16.mxu0 0
        %1057 = vmatpush1.bf16.msra.mxu0 0
        %1058 = vmatprep.subr.bf16.mxu0 0
        %1059 = vmatpush1.bf16.msra.mxu0 0
        %1060 = vmatprep.subr.bf16.mxu0 0
        %1061 = vmatpush1.bf16.msra.mxu0 0
        %1062 = vmatprep.subr.bf16.mxu0 0
        %1063 = vmatpush1.bf16.msra.mxu0 0
        %1064 = vmatprep.subr.bf16.mxu0 0
        %1065 = vmatpush1.bf16.msra.mxu0 0
        %1066 = vmatprep.subr.bf16.mxu0 0
        %1067 = vmatpush1.bf16.msra.mxu0 0
        %1068 = vmatprep.subr.bf16.mxu0 0
        %1069 = vmatpush1.bf16.msra.mxu0 0
        %1070 = vmatprep.subr.bf16.mxu0 0
        %1071 = vmatpush1.bf16.msra.mxu0 0
        %1072 = vmatprep.subr.bf16.mxu0 0
        %1073 = vmatpush1.bf16.msra.mxu0 0
        %1074 = vmatprep.subr.bf16.mxu0 0
        %1075 = vmatpush1.bf16.msra.mxu0 0
        %1076 = vmatprep.subr.bf16.mxu0 0
        %1077 = vmatpush1.bf16.msra.mxu0 0
        %1078 = vmatprep.subr.bf16.mxu0 0
        %1079 = vmatpush1.bf16.msra.mxu0 0
        %1080 = vmatprep.subr.bf16.mxu0 0
        %1081 = vmatpush1.bf16.msra.mxu0 0
        %1082 = vmatprep.subr.bf16.mxu0 0
        %1083 = vmatpush1.bf16.msra.mxu0 0
        %1084 = vmatprep.subr.bf16.mxu0 0
        %1085 = vmatpush1.bf16.msra.mxu0 0
        %1086 = vmatprep.mubr.bf16.mxu0 0
        %1087 = vmatmul.mubr.bf16.gmra.mrb[0].mxu0 %v1049
        %v1088 = vpop.f32.mrb[0].mxu0
        %v1089 = vadd.f32 0.0, %v1088
        %v1090 = vpop.f32.mrb[0].mxu0
        %v1091 = vpop.f32.mrb[0].mxu0
        %v1092 = vpop.f32.mrb[0].mxu0
        %1093 = vdwg.mxu0
        %1094 = vrot.lane.b32.xlu0 %v361, 56
        %v1095 = vpop.permute.xlu0 %1094
        %v1097 = vsel %vm367, %v1043, 0
        %v1100 = vsel %vm606, %v1095, 0
        %1102 = vmatprep.subr.bf16.mxu0 0
        %1103 = vmatpush1.bf16.msra.mxu0 %v1100
        %1104 = vmatprep.subr.bf16.mxu0 0
        %1105 = vmatpush1.bf16.msra.mxu0 0
        %1106 = vmatprep.subr.bf16.mxu0 0
        %1107 = vmatpush1.bf16.msra.mxu0 0
        %1108 = vmatprep.subr.bf16.mxu0 0
        %1109 = vmatpush1.bf16.msra.mxu0 0
        %1110 = vmatprep.subr.bf16.mxu0 0
        %1111 = vmatpush1.bf16.msra.mxu0 0
        %1112 = vmatprep.subr.bf16.mxu0 0
        %1113 = vmatpush1.bf16.msra.mxu0 0
        %1114 = vmatprep.subr.bf16.mxu0 0
        %1115 = vmatpush1.bf16.msra.mxu0 0
        %1116 = vmatprep.subr.bf16.mxu0 0
        %1117 = vmatpush1.bf16.msra.mxu0 0
        %1118 = vmatprep.subr.bf16.mxu0 0
        %1119 = vmatpush1.bf16.msra.mxu0 0
        %1120 = vmatprep.subr.bf16.mxu0 0
        %1121 = vmatpush1.bf16.msra.mxu0 0
        %1122 = vmatprep.subr.bf16.mxu0 0
        %1123 = vmatpush1.bf16.msra.mxu0 0
        %1124 = vmatprep.subr.bf16.mxu0 0
        %1125 = vmatpush1.bf16.msra.mxu0 0
        %1126 = vmatprep.subr.bf16.mxu0 0
        %1127 = vmatpush1.bf16.msra.mxu0 0
        %1128 = vmatprep.subr.bf16.mxu0 0
        %1129 = vmatpush1.bf16.msra.mxu0 0
        %1130 = vmatprep.subr.bf16.mxu0 0
        %1131 = vmatpush1.bf16.msra.mxu0 0
        %1132 = vmatprep.subr.bf16.mxu0 0
        %1133 = vmatpush1.bf16.msra.mxu0 0
        %1134 = vmatprep.mubr.bf16.mxu0 0
        %1135 = vmatmul.mubr.bf16.gmra.mrb[0].mxu0 %v1097
        %v1136 = vpop.f32.mrb[0].mxu0
        %v1137 = vadd.f32 0.0, %v1136
        %v1138 = vpop.f32.mrb[0].mxu0
        %v1139 = vpop.f32.mrb[0].mxu0
        %v1140 = vpop.f32.mrb[0].mxu0
        %1141 = vdwg.mxu0
        %1142 = vrot.lane.b32.xlu0 %v362, 56
        %v1143 = vpop.permute.xlu0 %1142
        %v1145 = vsel %vm367, %v1044, 0
        %v1148 = vsel %vm606, %v1143, 0
        %1150 = vmatprep.subr.bf16.mxu0 0
        %1151 = vmatpush1.bf16.msra.mxu0 %v1148
        %1152 = vmatprep.subr.bf16.mxu0 0
        %1153 = vmatpush1.bf16.msra.mxu0 0
        %1154 = vmatprep.subr.bf16.mxu0 0
        %1155 = vmatpush1.bf16.msra.mxu0 0
        %1156 = vmatprep.subr.bf16.mxu0 0
        %1157 = vmatpush1.bf16.msra.mxu0 0
        %1158 = vmatprep.subr.bf16.mxu0 0
        %1159 = vmatpush1.bf16.msra.mxu0 0
        %1160 = vmatprep.subr.bf16.mxu0 0
        %1161 = vmatpush1.bf16.msra.mxu0 0
        %1162 = vmatprep.subr.bf16.mxu0 0
        %1163 = vmatpush1.bf16.msra.mxu0 0
        %1164 = vmatprep.subr.bf16.mxu0 0
        %1165 = vmatpush1.bf16.msra.mxu0 0
        %1166 = vmatprep.subr.bf16.mxu0 0
        %1167 = vmatpush1.bf16.msra.mxu0 0
        %1168 = vmatprep.subr.bf16.mxu0 0
        %1169 = vmatpush1.bf16.msra.mxu0 0
        %1170 = vmatprep.subr.bf16.mxu0 0
        %1171 = vmatpush1.bf16.msra.mxu0 0
        %1172 = vmatprep.subr.bf16.mxu0 0
        %1173 = vmatpush1.bf16.msra.mxu0 0
        %1174 = vmatprep.subr.bf16.mxu0 0
        %1175 = vmatpush1.bf16.msra.mxu0 0
        %1176 = vmatprep.subr.bf16.mxu0 0
        %1177 = vmatpush1.bf16.msra.mxu0 0
        %1178 = vmatprep.subr.bf16.mxu0 0
        %1179 = vmatpush1.bf16.msra.mxu0 0
        %1180 = vmatprep.subr.bf16.mxu0 0
        %1181 = vmatpush1.bf16.msra.mxu0 0
        %1182 = vmatprep.mubr.bf16.mxu0 0
        %1183 = vmatmul.mubr.bf16.gmra.mrb[0].mxu0 %v1145
        %v1184 = vpop.f32.mrb[0].mxu0
        %v1185 = vadd.f32 0.0, %v1184
        %v1186 = vpop.f32.mrb[0].mxu0
        %v1187 = vpop.f32.mrb[0].mxu0
        %v1188 = vpop.f32.mrb[0].mxu0
        %1189 = vdwg.mxu0
        %1190 = vrot.lane.b32.xlu0 %v363, 56
        %v1191 = vpop.permute.xlu0 %1190
        %v1193 = vsel %vm367, %v1045, 0
        %v1196 = vsel %vm606, %v1191, 0
        %1198 = vmatprep.subr.bf16.mxu0 0
        %1199 = vmatpush1.bf16.msra.mxu0 %v1196
        %1200 = vmatprep.subr.bf16.mxu0 0
        %1201 = vmatpush1.bf16.msra.mxu0 0
        %1202 = vmatprep.subr.bf16.mxu0 0
        %1203 = vmatpush1.bf16.msra.mxu0 0
        %1204 = vmatprep.subr.bf16.mxu0 0
        %1205 = vmatpush1.bf16.msra.mxu0 0
        %1206 = vmatprep.subr.bf16.mxu0 0
        %1207 = vmatpush1.bf16.msra.mxu0 0
        %1208 = vmatprep.subr.bf16.mxu0 0
        %1209 = vmatpush1.bf16.msra.mxu0 0
        %1210 = vmatprep.subr.bf16.mxu0 0
        %1211 = vmatpush1.bf16.msra.mxu0 0
        %1212 = vmatprep.subr.bf16.mxu0 0
        %1213 = vmatpush1.bf16.msra.mxu0 0
        %1214 = vmatprep.subr.bf16.mxu0 0
        %1215 = vmatpush1.bf16.msra.mxu0 0
        %1216 = vmatprep.subr.bf16.mxu0 0
        %1217 = vmatpush1.bf16.msra.mxu0 0
        %1218 = vmatprep.subr.bf16.mxu0 0
        %1219 = vmatpush1.bf16.msra.mxu0 0
        %1220 = vmatprep.subr.bf16.mxu0 0
        %1221 = vmatpush1.bf16.msra.mxu0 0
        %1222 = vmatprep.subr.bf16.mxu0 0
        %1223 = vmatpush1.bf16.msra.mxu0 0
        %1224 = vmatprep.subr.bf16.mxu0 0
        %1225 = vmatpush1.bf16.msra.mxu0 0
        %1226 = vmatprep.subr.bf16.mxu0 0
        %1227 = vmatpush1.bf16.msra.mxu0 0
        %1228 = vmatprep.subr.bf16.mxu0 0
        %1229 = vmatpush1.bf16.msra.mxu0 0
        %1230 = vmatprep.mubr.bf16.mxu0 0
        %1231 = vmatmul.mubr.bf16.gmra.mrb[0].mxu0 %v1193
        %v1232 = vpop.f32.mrb[0].mxu0
        %v1233 = vadd.f32 0.0, %v1232
        %v1234 = vpop.f32.mrb[0].mxu0
        %v1235 = vpop.f32.mrb[0].mxu0
        %v1236 = vpop.f32.mrb[0].mxu0
        %1237 = vdwg.mxu0
        %v1238 = vrcp.pop %v1032
        %v1239 = vrcp.pop %v1035
        %v1240 = vrcp.pop %v1038
        %v1241 = vrcp.pop %v1041
        %v1242 = vmul.f32 %v1089, %v1238
        %v1243 = vmul.f32 %v1137, %v1239
        %v1244 = vmul.f32 %v1185, %v1240
        %v1245 = vmul.f32 %v1233, %v1241
        %1250 = vrot.lane.b32.xlu0 %v1242, 8
        %v1251 = vpop.permute.xlu0 %1250
        %1252 = vrot.lane.b32.xlu0 %v1243, 8
        %v1253 = vpop.permute.xlu0 %1252
        %1254 = vrot.lane.b32.xlu0 %v1244, 8
        %v1255 = vpop.permute.xlu0 %1254
        %1256 = vrot.lane.b32.xlu0 %v1245, 8
        %v1257 = vpop.permute.xlu0 %1256
        %vm1262 = vcmask 130112
        %1263 = vst.msk [vmem:[#allocation2] sm:$0xff] %vm1262, %v1251
        %1264 = vst.msk [vmem:[#allocation2 + $0x8] sm:$0xff] %vm1262, %v1253
        %1265 = vst.msk [vmem:[#allocation2 + $0x10] sm:$0xff] %vm1262, %v1255
        %1266 = vst.msk [vmem:[#allocation2 + $0x18] sm:$0xff] %vm1262, %v1257
        %1267 = vrot.lane.b32.xlu0 %v360, 112
        %v1268 = vpop.permute.xlu0 %1267
        %1269 = vrot.lane.b32.xlu0 %v360, 80
        %v1270 = vpop.permute.xlu0 %1269
        %v1272 = vsel %vm367, %v1268, 0
        %v1275 = vsel %vm367, %v1270, 0
        %1277 = vmatprep.subr.bf16.mxu0 0
        %1278 = vmatpush1.bf16.xpose.msra.mxu0 %v1275
        %1279 = vmatprep.subr.bf16.mxu0 0
        %1280 = vmatpush1.bf16.xpose.msra.mxu0 0
        %1281 = vmatprep.subr.bf16.mxu0 0
        %1282 = vmatpush1.bf16.xpose.msra.mxu0 0
        %1283 = vmatprep.subr.bf16.mxu0 0
        %1284 = vmatpush1.bf16.xpose.msra.mxu0 0
        %1285 = vmatprep.subr.bf16.mxu0 0
        %1286 = vmatpush1.bf16.xpose.msra.mxu0 0
        %1287 = vmatprep.subr.bf16.mxu0 0
        %1288 = vmatpush1.bf16.xpose.msra.mxu0 0
        %1289 = vmatprep.subr.bf16.mxu0 0
        %1290 = vmatpush1.bf16.xpose.msra.mxu0 0
        %1291 = vmatprep.subr.bf16.mxu0 0
        %1292 = vmatpush1.bf16.xpose.msra.mxu0 0
        %1293 = vmatprep.subr.bf16.mxu0 0
        %1294 = vmatpush1.bf16.xpose.msra.mxu0 0
        %1295 = vmatprep.subr.bf16.mxu0 0
        %1296 = vmatpush1.bf16.xpose.msra.mxu0 0
        %1297 = vmatprep.subr.bf16.mxu0 0
        %1298 = vmatpush1.bf16.xpose.msra.mxu0 0
        %1299 = vmatprep.subr.bf16.mxu0 0
        %1300 = vmatpush1.bf16.xpose.msra.mxu0 0
        %1301 = vmatprep.subr.bf16.mxu0 0
        %1302 = vmatpush1.bf16.xpose.msra.mxu0 0
        %1303 = vmatprep.subr.bf16.mxu0 0
        %1304 = vmatpush1.bf16.xpose.msra.mxu0 0
        %1305 = vmatprep.subr.bf16.mxu0 0
        %1306 = vmatpush1.bf16.xpose.msra.mxu0 0
        %1307 = vmatprep.subr.bf16.mxu0 0
        %1308 = vmatpush1.bf16.xpose.msra.mxu0 0
        %1309 = vmatprep.mubr.bf16.mxu0 0
        %1310 = vmatmul.mubr.bf16.gmra.mrb[0].mxu0 %v1272
        %v1311 = vpop.f32.mrb[0].mxu0
        %v1312 = vadd.f32 0.0, %v1311
        %v1313 = vpop.f32.mrb[0].mxu0
        %v1314 = vpop.f32.mrb[0].mxu0
        %v1315 = vpop.f32.mrb[0].mxu0
        %1316 = vdwg.mxu0
        %1317 = vrot.lane.b32.xlu0 %v361, 112
        %v1318 = vpop.permute.xlu0 %1317
        %1319 = vrot.lane.b32.xlu0 %v361, 80
        %v1320 = vpop.permute.xlu0 %1319
        %v1322 = vsel %vm367, %v1318, 0
        %v1325 = vsel %vm367, %v1320, 0
        %1327 = vmatprep.subr.bf16.mxu0 0
        %1328 = vmatpush1.bf16.xpose.msra.mxu0 %v1325
        %1329 = vmatprep.subr.bf16.mxu0 0
        %1330 = vmatpush1.bf16.xpose.msra.mxu0 0
        %1331 = vmatprep.subr.bf16.mxu0 0
        %1332 = vmatpush1.bf16.xpose.msra.mxu0 0
        %1333 = vmatprep.subr.bf16.mxu0 0
        %1334 = vmatpush1.bf16.xpose.msra.mxu0 0
        %1335 = vmatprep.subr.bf16.mxu0 0
        %1336 = vmatpush1.bf16.xpose.msra.mxu0 0
        %1337 = vmatprep.subr.bf16.mxu0 0
        %1338 = vmatpush1.bf16.xpose.msra.mxu0 0
        %1339 = vmatprep.subr.bf16.mxu0 0
        %1340 = vmatpush1.bf16.xpose.msra.mxu0 0
        %1341 = vmatprep.subr.bf16.mxu0 0
        %1342 = vmatpush1.bf16.xpose.msra.mxu0 0
        %1343 = vmatprep.subr.bf16.mxu0 0
        %1344 = vmatpush1.bf16.xpose.msra.mxu0 0
        %1345 = vmatprep.subr.bf16.mxu0 0
        %1346 = vmatpush1.bf16.xpose.msra.mxu0 0
        %1347 = vmatprep.subr.bf16.mxu0 0
        %1348 = vmatpush1.bf16.xpose.msra.mxu0 0
        %1349 = vmatprep.subr.bf16.mxu0 0
        %1350 = vmatpush1.bf16.xpose.msra.mxu0 0
        %1351 = vmatprep.subr.bf16.mxu0 0
        %1352 = vmatpush1.bf16.xpose.msra.mxu0 0
        %1353 = vmatprep.subr.bf16.mxu0 0
        %1354 = vmatpush1.bf16.xpose.msra.mxu0 0
        %1355 = vmatprep.subr.bf16.mxu0 0
        %1356 = vmatpush1.bf16.xpose.msra.mxu0 0
        %1357 = vmatprep.subr.bf16.mxu0 0
        %1358 = vmatpush1.bf16.xpose.msra.mxu0 0
        %1359 = vmatprep.mubr.bf16.mxu0 0
        %1360 = vmatmul.mubr.bf16.gmra.mrb[0].mxu0 %v1322
        %v1361 = vpop.f32.mrb[0].mxu0
        %v1362 = vadd.f32 0.0, %v1361
        %v1363 = vpop.f32.mrb[0].mxu0
        %v1364 = vpop.f32.mrb[0].mxu0
        %v1365 = vpop.f32.mrb[0].mxu0
        %1366 = vdwg.mxu0
        %1367 = vrot.lane.b32.xlu0 %v362, 112
        %v1368 = vpop.permute.xlu0 %1367
        %1369 = vrot.lane.b32.xlu0 %v362, 80
        %v1370 = vpop.permute.xlu0 %1369
        %v1372 = vsel %vm367, %v1368, 0
        %v1375 = vsel %vm367, %v1370, 0
        %1377 = vmatprep.subr.bf16.mxu0 0
        %1378 = vmatpush1.bf16.xpose.msra.mxu0 %v1375
        %1379 = vmatprep.subr.bf16.mxu0 0
        %1380 = vmatpush1.bf16.xpose.msra.mxu0 0
        %1381 = vmatprep.subr.bf16.mxu0 0
        %1382 = vmatpush1.bf16.xpose.msra.mxu0 0
        %1383 = vmatprep.subr.bf16.mxu0 0
        %1384 = vmatpush1.bf16.xpose.msra.mxu0 0
        %1385 = vmatprep.subr.bf16.mxu0 0
        %1386 = vmatpush1.bf16.xpose.msra.mxu0 0
        %1387 = vmatprep.subr.bf16.mxu0 0
        %1388 = vmatpush1.bf16.xpose.msra.mxu0 0
        %1389 = vmatprep.subr.bf16.mxu0 0
        %1390 = vmatpush1.bf16.xpose.msra.mxu0 0
        %1391 = vmatprep.subr.bf16.mxu0 0
        %1392 = vmatpush1.bf16.xpose.msra.mxu0 0
        %1393 = vmatprep.subr.bf16.mxu0 0
        %1394 = vmatpush1.bf16.xpose.msra.mxu0 0
        %1395 = vmatprep.subr.bf16.mxu0 0
        %1396 = vmatpush1.bf16.xpose.msra.mxu0 0
        %1397 = vmatprep.subr.bf16.mxu0 0
        %1398 = vmatpush1.bf16.xpose.msra.mxu0 0
        %1399 = vmatprep.subr.bf16.mxu0 0
        %1400 = vmatpush1.bf16.xpose.msra.mxu0 0
        %1401 = vmatprep.subr.bf16.mxu0 0
        %1402 = vmatpush1.bf16.xpose.msra.mxu0 0
        %1403 = vmatprep.subr.bf16.mxu0 0
        %1404 = vmatpush1.bf16.xpose.msra.mxu0 0
        %1405 = vmatprep.subr.bf16.mxu0 0
        %1406 = vmatpush1.bf16.xpose.msra.mxu0 0
        %1407 = vmatprep.subr.bf16.mxu0 0
        %1408 = vmatpush1.bf16.xpose.msra.mxu0 0
        %1409 = vmatprep.mubr.bf16.mxu0 0
        %1410 = vmatmul.mubr.bf16.gmra.mrb[0].mxu0 %v1372
        %v1411 = vpop.f32.mrb[0].mxu0
        %v1412 = vadd.f32 0.0, %v1411
        %v1413 = vpop.f32.mrb[0].mxu0
        %v1414 = vpop.f32.mrb[0].mxu0
        %v1415 = vpop.f32.mrb[0].mxu0
        %1416 = vdwg.mxu0
        %1417 = vrot.lane.b32.xlu0 %v363, 112
        %v1418 = vpop.permute.xlu0 %1417
        %1419 = vrot.lane.b32.xlu0 %v363, 80
        %v1420 = vpop.permute.xlu0 %1419
        %v1422 = vsel %vm367, %v1418, 0
        %v1425 = vsel %vm367, %v1420, 0
        %1427 = vmatprep.subr.bf16.mxu0 0
        %1428 = vmatpush1.bf16.xpose.msra.mxu0 %v1425
        %1429 = vmatprep.subr.bf16.mxu0 0
        %1430 = vmatpush1.bf16.xpose.msra.mxu0 0
        %1431 = vmatprep.subr.bf16.mxu0 0
        %1432 = vmatpush1.bf16.xpose.msra.mxu0 0
        %1433 = vmatprep.subr.bf16.mxu0 0
        %1434 = vmatpush1.bf16.xpose.msra.mxu0 0
        %1435 = vmatprep.subr.bf16.mxu0 0
        %1436 = vmatpush1.bf16.xpose.msra.mxu0 0
        %1437 = vmatprep.subr.bf16.mxu0 0
        %1438 = vmatpush1.bf16.xpose.msra.mxu0 0
        %1439 = vmatprep.subr.bf16.mxu0 0
        %1440 = vmatpush1.bf16.xpose.msra.mxu0 0
        %1441 = vmatprep.subr.bf16.mxu0 0
        %1442 = vmatpush1.bf16.xpose.msra.mxu0 0
        %1443 = vmatprep.subr.bf16.mxu0 0
        %1444 = vmatpush1.bf16.xpose.msra.mxu0 0
        %1445 = vmatprep.subr.bf16.mxu0 0
        %1446 = vmatpush1.bf16.xpose.msra.mxu0 0
        %1447 = vmatprep.subr.bf16.mxu0 0
        %1448 = vmatpush1.bf16.xpose.msra.mxu0 0
        %1449 = vmatprep.subr.bf16.mxu0 0
        %1450 = vmatpush1.bf16.xpose.msra.mxu0 0
        %1451 = vmatprep.subr.bf16.mxu0 0
        %1452 = vmatpush1.bf16.xpose.msra.mxu0 0
        %1453 = vmatprep.subr.bf16.mxu0 0
        %1454 = vmatpush1.bf16.xpose.msra.mxu0 0
        %1455 = vmatprep.subr.bf16.mxu0 0
        %1456 = vmatpush1.bf16.xpose.msra.mxu0 0
        %1457 = vmatprep.subr.bf16.mxu0 0
        %1458 = vmatpush1.bf16.xpose.msra.mxu0 0
        %1459 = vmatprep.mubr.bf16.mxu0 0
        %1460 = vmatmul.mubr.bf16.gmra.mrb[0].mxu0 %v1422
        %v1461 = vpop.f32.mrb[0].mxu0
        %v1462 = vadd.f32 0.0, %v1461
        %v1463 = vpop.f32.mrb[0].mxu0
        %v1464 = vpop.f32.mrb[0].mxu0
        %v1465 = vpop.f32.mrb[0].mxu0
        %1466 = vdwg.mxu0
        %v1467 = vsel %vm367, %v1312, -inf
        %1468 = vmax.xlane.f32.xlu0 %v1467
        %v1469 = vpop.xlane.xlu0 %1468
        %v1470 = vsel %vm367, %v1362, -inf
        %1471 = vmax.xlane.f32.xlu0 %v1470
        %v1472 = vpop.xlane.xlu0 %1471
        %v1473 = vsel %vm367, %v1412, -inf
        %1474 = vmax.xlane.f32.xlu0 %v1473
        %v1475 = vpop.xlane.xlu0 %1474
        %v1476 = vsel %vm367, %v1462, -inf
        %1477 = vmax.xlane.f32.xlu0 %v1476
        %v1478 = vpop.xlane.xlu0 %1477
        %v1479 = vsub.f32 %v1312, %v1469
        %v1480 = vsub.f32 %v1362, %v1472
        %v1481 = vsub.f32 %v1412, %v1475
        %v1482 = vsub.f32 %v1462, %v1478
        %v1483 = vmul.f32 %v1479, 1.442695
        %v1484 = vpow.pop %v1483
        %v1485 = vmul.f32 %v1480, 1.442695
        %v1486 = vpow.pop %v1485
        %v1487 = vmul.f32 %v1481, 1.442695
        %v1488 = vpow.pop %v1487
        %v1489 = vmul.f32 %v1482, 1.442695
        %v1490 = vpow.pop %v1489
        %v1491 = vsel %vm367, %v1484, 0.0
        %1492 = vadd.xlane.f32.xlu0 %v1491
        %v1493 = vpop.xlane.xlu0 %1492
        %v1494 = vsel %vm367, %v1486, 0.0
        %1495 = vadd.xlane.f32.xlu0 %v1494
        %v1496 = vpop.xlane.xlu0 %1495
        %v1497 = vsel %vm367, %v1488, 0.0
        %1498 = vadd.xlane.f32.xlu0 %v1497
        %v1499 = vpop.xlane.xlu0 %1498
        %v1500 = vsel %vm367, %v1490, 0.0
        %1501 = vadd.xlane.f32.xlu0 %v1500
        %v1502 = vpop.xlane.xlu0 %1501
        %v1503 = vpack.c.bf16 %v1484, %v1484
        %v1504 = vpack.c.bf16 %v1486, %v1486
        %v1505 = vpack.c.bf16 %v1488, %v1488
        %v1506 = vpack.c.bf16 %v1490, %v1490
        %1507 = vrot.lane.b32.xlu0 %v360, 48
        %v1508 = vpop.permute.xlu0 %1507
        %v1510 = vsel %vm367, %v1503, 0
        %v1513 = vsel %vm606, %v1508, 0
        %1515 = vmatprep.subr.bf16.mxu0 0
        %1516 = vmatpush1.bf16.msra.mxu0 %v1513
        %1517 = vmatprep.subr.bf16.mxu0 0
        %1518 = vmatpush1.bf16.msra.mxu0 0
        %1519 = vmatprep.subr.bf16.mxu0 0
        %1520 = vmatpush1.bf16.msra.mxu0 0
        %1521 = vmatprep.subr.bf16.mxu0 0
        %1522 = vmatpush1.bf16.msra.mxu0 0
        %1523 = vmatprep.subr.bf16.mxu0 0
        %1524 = vmatpush1.bf16.msra.mxu0 0
        %1525 = vmatprep.subr.bf16.mxu0 0
        %1526 = vmatpush1.bf16.msra.mxu0 0
        %1527 = vmatprep.subr.bf16.mxu0 0
        %1528 = vmatpush1.bf16.msra.mxu0 0
        %1529 = vmatprep.subr.bf16.mxu0 0
        %1530 = vmatpush1.bf16.msra.mxu0 0
        %1531 = vmatprep.subr.bf16.mxu0 0
        %1532 = vmatpush1.bf16.msra.mxu0 0
        %1533 = vmatprep.subr.bf16.mxu0 0
        %1534 = vmatpush1.bf16.msra.mxu0 0
        %1535 = vmatprep.subr.bf16.mxu0 0
        %1536 = vmatpush1.bf16.msra.mxu0 0
        %1537 = vmatprep.subr.bf16.mxu0 0
        %1538 = vmatpush1.bf16.msra.mxu0 0
        %1539 = vmatprep.subr.bf16.mxu0 0
        %1540 = vmatpush1.bf16.msra.mxu0 0
        %1541 = vmatprep.subr.bf16.mxu0 0
        %1542 = vmatpush1.bf16.msra.mxu0 0
        %1543 = vmatprep.subr.bf16.mxu0 0
        %1544 = vmatpush1.bf16.msra.mxu0 0
        %1545 = vmatprep.subr.bf16.mxu0 0
        %1546 = vmatpush1.bf16.msra.mxu0 0
        %1547 = vmatprep.mubr.bf16.mxu0 0
        %1548 = vmatmul.mubr.bf16.gmra.mrb[0].mxu0 %v1510
        %v1549 = vpop.f32.mrb[0].mxu0
        %v1550 = vadd.f32 0.0, %v1549
        %v1551 = vpop.f32.mrb[0].mxu0
        %v1552 = vpop.f32.mrb[0].mxu0
        %v1553 = vpop.f32.mrb[0].mxu0
        %1554 = vdwg.mxu0
        %1555 = vrot.lane.b32.xlu0 %v361, 48
        %v1556 = vpop.permute.xlu0 %1555
        %v1558 = vsel %vm367, %v1504, 0
        %v1561 = vsel %vm606, %v1556, 0
        %1563 = vmatprep.subr.bf16.mxu0 0
        %1564 = vmatpush1.bf16.msra.mxu0 %v1561
        %1565 = vmatprep.subr.bf16.mxu0 0
        %1566 = vmatpush1.bf16.msra.mxu0 0
        %1567 = vmatprep.subr.bf16.mxu0 0
        %1568 = vmatpush1.bf16.msra.mxu0 0
        %1569 = vmatprep.subr.bf16.mxu0 0
        %1570 = vmatpush1.bf16.msra.mxu0 0
        %1571 = vmatprep.subr.bf16.mxu0 0
        %1572 = vmatpush1.bf16.msra.mxu0 0
        %1573 = vmatprep.subr.bf16.mxu0 0
        %1574 = vmatpush1.bf16.msra.mxu0 0
        %1575 = vmatprep.subr.bf16.mxu0 0
        %1576 = vmatpush1.bf16.msra.mxu0 0
        %1577 = vmatprep.subr.bf16.mxu0 0
        %1578 = vmatpush1.bf16.msra.mxu0 0
        %1579 = vmatprep.subr.bf16.mxu0 0
        %1580 = vmatpush1.bf16.msra.mxu0 0
        %1581 = vmatprep.subr.bf16.mxu0 0
        %1582 = vmatpush1.bf16.msra.mxu0 0
        %1583 = vmatprep.subr.bf16.mxu0 0
        %1584 = vmatpush1.bf16.msra.mxu0 0
        %1585 = vmatprep.subr.bf16.mxu0 0
        %1586 = vmatpush1.bf16.msra.mxu0 0
        %1587 = vmatprep.subr.bf16.mxu0 0
        %1588 = vmatpush1.bf16.msra.mxu0 0
        %1589 = vmatprep.subr.bf16.mxu0 0
        %1590 = vmatpush1.bf16.msra.mxu0 0
        %1591 = vmatprep.subr.bf16.mxu0 0
        %1592 = vmatpush1.bf16.msra.mxu0 0
        %1593 = vmatprep.subr.bf16.mxu0 0
        %1594 = vmatpush1.bf16.msra.mxu0 0
        %1595 = vmatprep.mubr.bf16.mxu0 0
        %1596 = vmatmul.mubr.bf16.gmra.mrb[0].mxu0 %v1558
        %v1597 = vpop.f32.mrb[0].mxu0
        %v1598 = vadd.f32 0.0, %v1597
        %v1599 = vpop.f32.mrb[0].mxu0
        %v1600 = vpop.f32.mrb[0].mxu0
        %v1601 = vpop.f32.mrb[0].mxu0
        %1602 = vdwg.mxu0
        %1603 = vrot.lane.b32.xlu0 %v362, 48
        %v1604 = vpop.permute.xlu0 %1603
        %v1606 = vsel %vm367, %v1505, 0
        %v1609 = vsel %vm606, %v1604, 0
        %1611 = vmatprep.subr.bf16.mxu0 0
        %1612 = vmatpush1.bf16.msra.mxu0 %v1609
        %1613 = vmatprep.subr.bf16.mxu0 0
        %1614 = vmatpush1.bf16.msra.mxu0 0
        %1615 = vmatprep.subr.bf16.mxu0 0
        %1616 = vmatpush1.bf16.msra.mxu0 0
        %1617 = vmatprep.subr.bf16.mxu0 0
        %1618 = vmatpush1.bf16.msra.mxu0 0
        %1619 = vmatprep.subr.bf16.mxu0 0
        %1620 = vmatpush1.bf16.msra.mxu0 0
        %1621 = vmatprep.subr.bf16.mxu0 0
        %1622 = vmatpush1.bf16.msra.mxu0 0
        %1623 = vmatprep.subr.bf16.mxu0 0
        %1624 = vmatpush1.bf16.msra.mxu0 0
        %1625 = vmatprep.subr.bf16.mxu0 0
        %1626 = vmatpush1.bf16.msra.mxu0 0
        %1627 = vmatprep.subr.bf16.mxu0 0
        %1628 = vmatpush1.bf16.msra.mxu0 0
        %1629 = vmatprep.subr.bf16.mxu0 0
        %1630 = vmatpush1.bf16.msra.mxu0 0
        %1631 = vmatprep.subr.bf16.mxu0 0
        %1632 = vmatpush1.bf16.msra.mxu0 0
        %1633 = vmatprep.subr.bf16.mxu0 0
        %1634 = vmatpush1.bf16.msra.mxu0 0
        %1635 = vmatprep.subr.bf16.mxu0 0
        %1636 = vmatpush1.bf16.msra.mxu0 0
        %1637 = vmatprep.subr.bf16.mxu0 0
        %1638 = vmatpush1.bf16.msra.mxu0 0
        %1639 = vmatprep.subr.bf16.mxu0 0
        %1640 = vmatpush1.bf16.msra.mxu0 0
        %1641 = vmatprep.subr.bf16.mxu0 0
        %1642 = vmatpush1.bf16.msra.mxu0 0
        %1643 = vmatprep.mubr.bf16.mxu0 0
        %1644 = vmatmul.mubr.bf16.gmra.mrb[0].mxu0 %v1606
        %v1645 = vpop.f32.mrb[0].mxu0
        %v1646 = vadd.f32 0.0, %v1645
        %v1647 = vpop.f32.mrb[0].mxu0
        %v1648 = vpop.f32.mrb[0].mxu0
        %v1649 = vpop.f32.mrb[0].mxu0
        %1650 = vdwg.mxu0
        %1651 = vrot.lane.b32.xlu0 %v363, 48
        %v1652 = vpop.permute.xlu0 %1651
        %v1654 = vsel %vm367, %v1506, 0
        %v1657 = vsel %vm606, %v1652, 0
        %1659 = vmatprep.subr.bf16.mxu0 0
        %1660 = vmatpush1.bf16.msra.mxu0 %v1657
        %1661 = vmatprep.subr.bf16.mxu0 0
        %1662 = vmatpush1.bf16.msra.mxu0 0
        %1663 = vmatprep.subr.bf16.mxu0 0
        %1664 = vmatpush1.bf16.msra.mxu0 0
        %1665 = vmatprep.subr.bf16.mxu0 0
        %1666 = vmatpush1.bf16.msra.mxu0 0
        %1667 = vmatprep.subr.bf16.mxu0 0
        %1668 = vmatpush1.bf16.msra.mxu0 0
        %1669 = vmatprep.subr.bf16.mxu0 0
        %1670 = vmatpush1.bf16.msra.mxu0 0
        %1671 = vmatprep.subr.bf16.mxu0 0
        %1672 = vmatpush1.bf16.msra.mxu0 0
        %1673 = vmatprep.subr.bf16.mxu0 0
        %1674 = vmatpush1.bf16.msra.mxu0 0
        %1675 = vmatprep.subr.bf16.mxu0 0
        %1676 = vmatpush1.bf16.msra.mxu0 0
        %1677 = vmatprep.subr.bf16.mxu0 0
        %1678 = vmatpush1.bf16.msra.mxu0 0
        %1679 = vmatprep.subr.bf16.mxu0 0
        %1680 = vmatpush1.bf16.msra.mxu0 0
        %1681 = vmatprep.subr.bf16.mxu0 0
        %1682 = vmatpush1.bf16.msra.mxu0 0
        %1683 = vmatprep.subr.bf16.mxu0 0
        %1684 = vmatpush1.bf16.msra.mxu0 0
        %1685 = vmatprep.subr.bf16.mxu0 0
        %1686 = vmatpush1.bf16.msra.mxu0 0
        %1687 = vmatprep.subr.bf16.mxu0 0
        %1688 = vmatpush1.bf16.msra.mxu0 0
        %1689 = vmatprep.subr.bf16.mxu0 0
        %1690 = vmatpush1.bf16.msra.mxu0 0
        %1691 = vmatprep.mubr.bf16.mxu0 0
        %1692 = vmatmul.mubr.bf16.gmra.mrb[0].mxu0 %v1654
        %v1693 = vpop.f32.mrb[0].mxu0
        %v1694 = vadd.f32 0.0, %v1693
        %v1695 = vpop.f32.mrb[0].mxu0
        %v1696 = vpop.f32.mrb[0].mxu0
        %v1697 = vpop.f32.mrb[0].mxu0
        %1698 = vdwg.mxu0
        %v1699 = vrcp.pop %v1493
        %v1700 = vrcp.pop %v1496
        %v1701 = vrcp.pop %v1499
        %v1702 = vrcp.pop %v1502
        %v1703 = vmul.f32 %v1550, %v1699
        %v1704 = vmul.f32 %v1598, %v1700
        %v1705 = vmul.f32 %v1646, %v1701
        %v1706 = vmul.f32 %v1694, %v1702
        %1711 = vrot.lane.b32.xlu0 %v1703, 16
        %v1712 = vpop.permute.xlu0 %1711
        %1713 = vrot.lane.b32.xlu0 %v1704, 16
        %v1714 = vpop.permute.xlu0 %1713
        %1715 = vrot.lane.b32.xlu0 %v1705, 16
        %v1716 = vpop.permute.xlu0 %1715
        %1717 = vrot.lane.b32.xlu0 %v1706, 16
        %v1718 = vpop.permute.xlu0 %1717
        %vm1723 = vcmask 195712
        %1724 = vst.msk [vmem:[#allocation2] sm:$0xff] %vm1723, %v1712
        %1725 = vst.msk [vmem:[#allocation2 + $0x8] sm:$0xff] %vm1723, %v1714
        %1726 = vst.msk [vmem:[#allocation2 + $0x10] sm:$0xff] %vm1723, %v1716
        %1727 = vst.msk [vmem:[#allocation2 + $0x18] sm:$0xff] %vm1723, %v1718
        %1728 = vrot.lane.b32.xlu0 %v360, 104
        %v1729 = vpop.permute.xlu0 %1728
        %1730 = vrot.lane.b32.xlu0 %v360, 72
        %v1731 = vpop.permute.xlu0 %1730
        %v1733 = vsel %vm367, %v1729, 0
        %v1736 = vsel %vm367, %v1731, 0
        %1738 = vmatprep.subr.bf16.mxu0 0
        %1739 = vmatpush1.bf16.xpose.msra.mxu0 %v1736
        %1740 = vmatprep.subr.bf16.mxu0 0
        %1741 = vmatpush1.bf16.xpose.msra.mxu0 0
        %1742 = vmatprep.subr.bf16.mxu0 0
        %1743 = vmatpush1.bf16.xpose.msra.mxu0 0
        %1744 = vmatprep.subr.bf16.mxu0 0
        %1745 = vmatpush1.bf16.xpose.msra.mxu0 0
        %1746 = vmatprep.subr.bf16.mxu0 0
        %1747 = vmatpush1.bf16.xpose.msra.mxu0 0
        %1748 = vmatprep.subr.bf16.mxu0 0
        %1749 = vmatpush1.bf16.xpose.msra.mxu0 0
        %1750 = vmatprep.subr.bf16.mxu0 0
        %1751 = vmatpush1.bf16.xpose.msra.mxu0 0
        %1752 = vmatprep.subr.bf16.mxu0 0
        %1753 = vmatpush1.bf16.xpose.msra.mxu0 0
        %1754 = vmatprep.subr.bf16.mxu0 0
        %1755 = vmatpush1.bf16.xpose.msra.mxu0 0
        %1756 = vmatprep.subr.bf16.mxu0 0
        %1757 = vmatpush1.bf16.xpose.msra.mxu0 0
        %1758 = vmatprep.subr.bf16.mxu0 0
        %1759 = vmatpush1.bf16.xpose.msra.mxu0 0
        %1760 = vmatprep.subr.bf16.mxu0 0
        %1761 = vmatpush1.bf16.xpose.msra.mxu0 0
        %1762 = vmatprep.subr.bf16.mxu0 0
        %1763 = vmatpush1.bf16.xpose.msra.mxu0 0
        %1764 = vmatprep.subr.bf16.mxu0 0
        %1765 = vmatpush1.bf16.xpose.msra.mxu0 0
        %1766 = vmatprep.subr.bf16.mxu0 0
        %1767 = vmatpush1.bf16.xpose.msra.mxu0 0
        %1768 = vmatprep.subr.bf16.mxu0 0
        %1769 = vmatpush1.bf16.xpose.msra.mxu0 0
        %1770 = vmatprep.mubr.bf16.mxu0 0
        %1771 = vmatmul.mubr.bf16.gmra.mrb[0].mxu0 %v1733
        %v1772 = vpop.f32.mrb[0].mxu0
        %v1773 = vadd.f32 0.0, %v1772
        %v1774 = vpop.f32.mrb[0].mxu0
        %v1775 = vpop.f32.mrb[0].mxu0
        %v1776 = vpop.f32.mrb[0].mxu0
        %1777 = vdwg.mxu0
        %1778 = vrot.lane.b32.xlu0 %v361, 104
        %v1779 = vpop.permute.xlu0 %1778
        %1780 = vrot.lane.b32.xlu0 %v361, 72
        %v1781 = vpop.permute.xlu0 %1780
        %v1783 = vsel %vm367, %v1779, 0
        %v1786 = vsel %vm367, %v1781, 0
        %1788 = vmatprep.subr.bf16.mxu0 0
        %1789 = vmatpush1.bf16.xpose.msra.mxu0 %v1786
        %1790 = vmatprep.subr.bf16.mxu0 0
        %1791 = vmatpush1.bf16.xpose.msra.mxu0 0
        %1792 = vmatprep.subr.bf16.mxu0 0
        %1793 = vmatpush1.bf16.xpose.msra.mxu0 0
        %1794 = vmatprep.subr.bf16.mxu0 0
        %1795 = vmatpush1.bf16.xpose.msra.mxu0 0
        %1796 = vmatprep.subr.bf16.mxu0 0
        %1797 = vmatpush1.bf16.xpose.msra.mxu0 0
        %1798 = vmatprep.subr.bf16.mxu0 0
        %1799 = vmatpush1.bf16.xpose.msra.mxu0 0
        %1800 = vmatprep.subr.bf16.mxu0 0
        %1801 = vmatpush1.bf16.xpose.msra.mxu0 0
        %1802 = vmatprep.subr.bf16.mxu0 0
        %1803 = vmatpush1.bf16.xpose.msra.mxu0 0
        %1804 = vmatprep.subr.bf16.mxu0 0
        %1805 = vmatpush1.bf16.xpose.msra.mxu0 0
        %1806 = vmatprep.subr.bf16.mxu0 0
        %1807 = vmatpush1.bf16.xpose.msra.mxu0 0
        %1808 = vmatprep.subr.bf16.mxu0 0
        %1809 = vmatpush1.bf16.xpose.msra.mxu0 0
        %1810 = vmatprep.subr.bf16.mxu0 0
        %1811 = vmatpush1.bf16.xpose.msra.mxu0 0
        %1812 = vmatprep.subr.bf16.mxu0 0
        %1813 = vmatpush1.bf16.xpose.msra.mxu0 0
        %1814 = vmatprep.subr.bf16.mxu0 0
        %1815 = vmatpush1.bf16.xpose.msra.mxu0 0
        %1816 = vmatprep.subr.bf16.mxu0 0
        %1817 = vmatpush1.bf16.xpose.msra.mxu0 0
        %1818 = vmatprep.subr.bf16.mxu0 0
        %1819 = vmatpush1.bf16.xpose.msra.mxu0 0
        %1820 = vmatprep.mubr.bf16.mxu0 0
        %1821 = vmatmul.mubr.bf16.gmra.mrb[0].mxu0 %v1783
        %v1822 = vpop.f32.mrb[0].mxu0
        %v1823 = vadd.f32 0.0, %v1822
        %v1824 = vpop.f32.mrb[0].mxu0
        %v1825 = vpop.f32.mrb[0].mxu0
        %v1826 = vpop.f32.mrb[0].mxu0
        %1827 = vdwg.mxu0
        %1828 = vrot.lane.b32.xlu0 %v362, 104
        %v1829 = vpop.permute.xlu0 %1828
        %1830 = vrot.lane.b32.xlu0 %v362, 72
        %v1831 = vpop.permute.xlu0 %1830
        %v1833 = vsel %vm367, %v1829, 0
        %v1836 = vsel %vm367, %v1831, 0
        %1838 = vmatprep.subr.bf16.mxu0 0
        %1839 = vmatpush1.bf16.xpose.msra.mxu0 %v1836
        %1840 = vmatprep.subr.bf16.mxu0 0
        %1841 = vmatpush1.bf16.xpose.msra.mxu0 0
        %1842 = vmatprep.subr.bf16.mxu0 0
        %1843 = vmatpush1.bf16.xpose.msra.mxu0 0
        %1844 = vmatprep.subr.bf16.mxu0 0
        %1845 = vmatpush1.bf16.xpose.msra.mxu0 0
        %1846 = vmatprep.subr.bf16.mxu0 0
        %1847 = vmatpush1.bf16.xpose.msra.mxu0 0
        %1848 = vmatprep.subr.bf16.mxu0 0
        %1849 = vmatpush1.bf16.xpose.msra.mxu0 0
        %1850 = vmatprep.subr.bf16.mxu0 0
        %1851 = vmatpush1.bf16.xpose.msra.mxu0 0
        %1852 = vmatprep.subr.bf16.mxu0 0
        %1853 = vmatpush1.bf16.xpose.msra.mxu0 0
        %1854 = vmatprep.subr.bf16.mxu0 0
        %1855 = vmatpush1.bf16.xpose.msra.mxu0 0
        %1856 = vmatprep.subr.bf16.mxu0 0
        %1857 = vmatpush1.bf16.xpose.msra.mxu0 0
        %1858 = vmatprep.subr.bf16.mxu0 0
        %1859 = vmatpush1.bf16.xpose.msra.mxu0 0
        %1860 = vmatprep.subr.bf16.mxu0 0
        %1861 = vmatpush1.bf16.xpose.msra.mxu0 0
        %1862 = vmatprep.subr.bf16.mxu0 0
        %1863 = vmatpush1.bf16.xpose.msra.mxu0 0
        %1864 = vmatprep.subr.bf16.mxu0 0
        %1865 = vmatpush1.bf16.xpose.msra.mxu0 0
        %1866 = vmatprep.subr.bf16.mxu0 0
        %1867 = vmatpush1.bf16.xpose.msra.mxu0 0
        %1868 = vmatprep.subr.bf16.mxu0 0
        %1869 = vmatpush1.bf16.xpose.msra.mxu0 0
        %1870 = vmatprep.mubr.bf16.mxu0 0
        %1871 = vmatmul.mubr.bf16.gmra.mrb[0].mxu0 %v1833
        %v1872 = vpop.f32.mrb[0].mxu0
        %v1873 = vadd.f32 0.0, %v1872
        %v1874 = vpop.f32.mrb[0].mxu0
        %v1875 = vpop.f32.mrb[0].mxu0
        %v1876 = vpop.f32.mrb[0].mxu0
        %1877 = vdwg.mxu0
        %1878 = vrot.lane.b32.xlu0 %v363, 104
        %v1879 = vpop.permute.xlu0 %1878
        %1880 = vrot.lane.b32.xlu0 %v363, 72
        %v1881 = vpop.permute.xlu0 %1880
        %v1883 = vsel %vm367, %v1879, 0
        %v1886 = vsel %vm367, %v1881, 0
        %1888 = vmatprep.subr.bf16.mxu0 0
        %1889 = vmatpush1.bf16.xpose.msra.mxu0 %v1886
        %1890 = vmatprep.subr.bf16.mxu0 0
        %1891 = vmatpush1.bf16.xpose.msra.mxu0 0
        %1892 = vmatprep.subr.bf16.mxu0 0
        %1893 = vmatpush1.bf16.xpose.msra.mxu0 0
        %1894 = vmatprep.subr.bf16.mxu0 0
        %1895 = vmatpush1.bf16.xpose.msra.mxu0 0
        %1896 = vmatprep.subr.bf16.mxu0 0
        %1897 = vmatpush1.bf16.xpose.msra.mxu0 0
        %1898 = vmatprep.subr.bf16.mxu0 0
        %1899 = vmatpush1.bf16.xpose.msra.mxu0 0
        %1900 = vmatprep.subr.bf16.mxu0 0
        %1901 = vmatpush1.bf16.xpose.msra.mxu0 0
        %1902 = vmatprep.subr.bf16.mxu0 0
        %1903 = vmatpush1.bf16.xpose.msra.mxu0 0
        %1904 = vmatprep.subr.bf16.mxu0 0
        %1905 = vmatpush1.bf16.xpose.msra.mxu0 0
        %1906 = vmatprep.subr.bf16.mxu0 0
        %1907 = vmatpush1.bf16.xpose.msra.mxu0 0
        %1908 = vmatprep.subr.bf16.mxu0 0
        %1909 = vmatpush1.bf16.xpose.msra.mxu0 0
        %1910 = vmatprep.subr.bf16.mxu0 0
        %1911 = vmatpush1.bf16.xpose.msra.mxu0 0
        %1912 = vmatprep.subr.bf16.mxu0 0
        %1913 = vmatpush1.bf16.xpose.msra.mxu0 0
        %1914 = vmatprep.subr.bf16.mxu0 0
        %1915 = vmatpush1.bf16.xpose.msra.mxu0 0
        %1916 = vmatprep.subr.bf16.mxu0 0
        %1917 = vmatpush1.bf16.xpose.msra.mxu0 0
        %1918 = vmatprep.subr.bf16.mxu0 0
        %1919 = vmatpush1.bf16.xpose.msra.mxu0 0
        %1920 = vmatprep.mubr.bf16.mxu0 0
        %1921 = vmatmul.mubr.bf16.gmra.mrb[0].mxu0 %v1883
        %v1922 = vpop.f32.mrb[0].mxu0
        %v1923 = vadd.f32 0.0, %v1922
        %v1924 = vpop.f32.mrb[0].mxu0
        %v1925 = vpop.f32.mrb[0].mxu0
        %v1926 = vpop.f32.mrb[0].mxu0
        %1927 = vdwg.mxu0
        %v1928 = vsel %vm367, %v1773, -inf
        %1929 = vmax.xlane.f32.xlu0 %v1928
        %v1930 = vpop.xlane.xlu0 %1929
        %v1931 = vsel %vm367, %v1823, -inf
        %1932 = vmax.xlane.f32.xlu0 %v1931
        %v1933 = vpop.xlane.xlu0 %1932
        %v1934 = vsel %vm367, %v1873, -inf
        %1935 = vmax.xlane.f32.xlu0 %v1934
        %v1936 = vpop.xlane.xlu0 %1935
        %v1937 = vsel %vm367, %v1923, -inf
        %1938 = vmax.xlane.f32.xlu0 %v1937
        %v1939 = vpop.xlane.xlu0 %1938
        %v1940 = vsub.f32 %v1773, %v1930
        %v1941 = vsub.f32 %v1823, %v1933
        %v1942 = vsub.f32 %v1873, %v1936
        %v1943 = vsub.f32 %v1923, %v1939
        %v1944 = vmul.f32 %v1940, 1.442695
        %v1945 = vpow.pop %v1944
        %v1946 = vmul.f32 %v1941, 1.442695
        %v1947 = vpow.pop %v1946
        %v1948 = vmul.f32 %v1942, 1.442695
        %v1949 = vpow.pop %v1948
        %v1950 = vmul.f32 %v1943, 1.442695
        %v1951 = vpow.pop %v1950
        %v1952 = vsel %vm367, %v1945, 0.0
        %1953 = vadd.xlane.f32.xlu0 %v1952
        %v1954 = vpop.xlane.xlu0 %1953
        %v1955 = vsel %vm367, %v1947, 0.0
        %1956 = vadd.xlane.f32.xlu0 %v1955
        %v1957 = vpop.xlane.xlu0 %1956
        %v1958 = vsel %vm367, %v1949, 0.0
        %1959 = vadd.xlane.f32.xlu0 %v1958
        %v1960 = vpop.xlane.xlu0 %1959
        %v1961 = vsel %vm367, %v1951, 0.0
        %1962 = vadd.xlane.f32.xlu0 %v1961
        %v1963 = vpop.xlane.xlu0 %1962
        %v1964 = vpack.c.bf16 %v1945, %v1945
        %v1965 = vpack.c.bf16 %v1947, %v1947
        %v1966 = vpack.c.bf16 %v1949, %v1949
        %v1967 = vpack.c.bf16 %v1951, %v1951
        %1968 = vrot.lane.b32.xlu0 %v360, 40
        %v1969 = vpop.permute.xlu0 %1968
        %v1971 = vsel %vm367, %v1964, 0
        %v1974 = vsel %vm606, %v1969, 0
        %1976 = vmatprep.subr.bf16.mxu0 0
        %1977 = vmatpush1.bf16.msra.mxu0 %v1974
        %1978 = vmatprep.subr.bf16.mxu0 0
        %1979 = vmatpush1.bf16.msra.mxu0 0
        %1980 = vmatprep.subr.bf16.mxu0 0
        %1981 = vmatpush1.bf16.msra.mxu0 0
        %1982 = vmatprep.subr.bf16.mxu0 0
        %1983 = vmatpush1.bf16.msra.mxu0 0
        %1984 = vmatprep.subr.bf16.mxu0 0
        %1985 = vmatpush1.bf16.msra.mxu0 0
        %1986 = vmatprep.subr.bf16.mxu0 0
        %1987 = vmatpush1.bf16.msra.mxu0 0
        %1988 = vmatprep.subr.bf16.mxu0 0
        %1989 = vmatpush1.bf16.msra.mxu0 0
        %1990 = vmatprep.subr.bf16.mxu0 0
        %1991 = vmatpush1.bf16.msra.mxu0 0
        %1992 = vmatprep.subr.bf16.mxu0 0
        %1993 = vmatpush1.bf16.msra.mxu0 0
        %1994 = vmatprep.subr.bf16.mxu0 0
        %1995 = vmatpush1.bf16.msra.mxu0 0
        %1996 = vmatprep.subr.bf16.mxu0 0
        %1997 = vmatpush1.bf16.msra.mxu0 0
        %1998 = vmatprep.subr.bf16.mxu0 0
        %1999 = vmatpush1.bf16.msra.mxu0 0
        %2000 = vmatprep.subr.bf16.mxu0 0
        %2001 = vmatpush1.bf16.msra.mxu0 0
        %2002 = vmatprep.subr.bf16.mxu0 0
        %2003 = vmatpush1.bf16.msra.mxu0 0
        %2004 = vmatprep.subr.bf16.mxu0 0
        %2005 = vmatpush1.bf16.msra.mxu0 0
        %2006 = vmatprep.subr.bf16.mxu0 0
        %2007 = vmatpush1.bf16.msra.mxu0 0
        %2008 = vmatprep.mubr.bf16.mxu0 0
        %2009 = vmatmul.mubr.bf16.gmra.mrb[0].mxu0 %v1971
        %v2010 = vpop.f32.mrb[0].mxu0
        %v2011 = vadd.f32 0.0, %v2010
        %v2012 = vpop.f32.mrb[0].mxu0
        %v2013 = vpop.f32.mrb[0].mxu0
        %v2014 = vpop.f32.mrb[0].mxu0
        %2015 = vdwg.mxu0
        %2016 = vrot.lane.b32.xlu0 %v361, 40
        %v2017 = vpop.permute.xlu0 %2016
        %v2019 = vsel %vm367, %v1965, 0
        %v2022 = vsel %vm606, %v2017, 0
        %2024 = vmatprep.subr.bf16.mxu0 0
        %2025 = vmatpush1.bf16.msra.mxu0 %v2022
        %2026 = vmatprep.subr.bf16.mxu0 0
        %2027 = vmatpush1.bf16.msra.mxu0 0
        %2028 = vmatprep.subr.bf16.mxu0 0
        %2029 = vmatpush1.bf16.msra.mxu0 0
        %2030 = vmatprep.subr.bf16.mxu0 0
        %2031 = vmatpush1.bf16.msra.mxu0 0
        %2032 = vmatprep.subr.bf16.mxu0 0
        %2033 = vmatpush1.bf16.msra.mxu0 0
        %2034 = vmatprep.subr.bf16.mxu0 0
        %2035 = vmatpush1.bf16.msra.mxu0 0
        %2036 = vmatprep.subr.bf16.mxu0 0
        %2037 = vmatpush1.bf16.msra.mxu0 0
        %2038 = vmatprep.subr.bf16.mxu0 0
        %2039 = vmatpush1.bf16.msra.mxu0 0
        %2040 = vmatprep.subr.bf16.mxu0 0
        %2041 = vmatpush1.bf16.msra.mxu0 0
        %2042 = vmatprep.subr.bf16.mxu0 0
        %2043 = vmatpush1.bf16.msra.mxu0 0
        %2044 = vmatprep.subr.bf16.mxu0 0
        %2045 = vmatpush1.bf16.msra.mxu0 0
        %2046 = vmatprep.subr.bf16.mxu0 0
        %2047 = vmatpush1.bf16.msra.mxu0 0
        %2048 = vmatprep.subr.bf16.mxu0 0
        %2049 = vmatpush1.bf16.msra.mxu0 0
        %2050 = vmatprep.subr.bf16.mxu0 0
        %2051 = vmatpush1.bf16.msra.mxu0 0
        %2052 = vmatprep.subr.bf16.mxu0 0
        %2053 = vmatpush1.bf16.msra.mxu0 0
        %2054 = vmatprep.subr.bf16.mxu0 0
        %2055 = vmatpush1.bf16.msra.mxu0 0
        %2056 = vmatprep.mubr.bf16.mxu0 0
        %2057 = vmatmul.mubr.bf16.gmra.mrb[0].mxu0 %v2019
        %v2058 = vpop.f32.mrb[0].mxu0
        %v2059 = vadd.f32 0.0, %v2058
        %v2060 = vpop.f32.mrb[0].mxu0
        %v2061 = vpop.f32.mrb[0].mxu0
        %v2062 = vpop.f32.mrb[0].mxu0
        %2063 = vdwg.mxu0
        %2064 = vrot.lane.b32.xlu0 %v362, 40
        %v2065 = vpop.permute.xlu0 %2064
        %v2067 = vsel %vm367, %v1966, 0
        %v2070 = vsel %vm606, %v2065, 0
        %2072 = vmatprep.subr.bf16.mxu0 0
        %2073 = vmatpush1.bf16.msra.mxu0 %v2070
        %2074 = vmatprep.subr.bf16.mxu0 0
        %2075 = vmatpush1.bf16.msra.mxu0 0
        %2076 = vmatprep.subr.bf16.mxu0 0
        %2077 = vmatpush1.bf16.msra.mxu0 0
        %2078 = vmatprep.subr.bf16.mxu0 0
        %2079 = vmatpush1.bf16.msra.mxu0 0
        %2080 = vmatprep.subr.bf16.mxu0 0
        %2081 = vmatpush1.bf16.msra.mxu0 0
        %2082 = vmatprep.subr.bf16.mxu0 0
        %2083 = vmatpush1.bf16.msra.mxu0 0
        %2084 = vmatprep.subr.bf16.mxu0 0
        %2085 = vmatpush1.bf16.msra.mxu0 0
        %2086 = vmatprep.subr.bf16.mxu0 0
        %2087 = vmatpush1.bf16.msra.mxu0 0
        %2088 = vmatprep.subr.bf16.mxu0 0
        %2089 = vmatpush1.bf16.msra.mxu0 0
        %2090 = vmatprep.subr.bf16.mxu0 0
        %2091 = vmatpush1.bf16.msra.mxu0 0
        %2092 = vmatprep.subr.bf16.mxu0 0
        %2093 = vmatpush1.bf16.msra.mxu0 0
        %2094 = vmatprep.subr.bf16.mxu0 0
        %2095 = vmatpush1.bf16.msra.mxu0 0
        %2096 = vmatprep.subr.bf16.mxu0 0
        %2097 = vmatpush1.bf16.msra.mxu0 0
        %2098 = vmatprep.subr.bf16.mxu0 0
        %2099 = vmatpush1.bf16.msra.mxu0 0
        %2100 = vmatprep.subr.bf16.mxu0 0
        %2101 = vmatpush1.bf16.msra.mxu0 0
        %2102 = vmatprep.subr.bf16.mxu0 0
        %2103 = vmatpush1.bf16.msra.mxu0 0
        %2104 = vmatprep.mubr.bf16.mxu0 0
        %2105 = vmatmul.mubr.bf16.gmra.mrb[0].mxu0 %v2067
        %v2106 = vpop.f32.mrb[0].mxu0
        %v2107 = vadd.f32 0.0, %v2106
        %v2108 = vpop.f32.mrb[0].mxu0
        %v2109 = vpop.f32.mrb[0].mxu0
        %v2110 = vpop.f32.mrb[0].mxu0
        %2111 = vdwg.mxu0
        %2112 = vrot.lane.b32.xlu0 %v363, 40
        %v2113 = vpop.permute.xlu0 %2112
        %v2115 = vsel %vm367, %v1967, 0
        %v2118 = vsel %vm606, %v2113, 0
        %2120 = vmatprep.subr.bf16.mxu0 0
        %2121 = vmatpush1.bf16.msra.mxu0 %v2118
        %2122 = vmatprep.subr.bf16.mxu0 0
        %2123 = vmatpush1.bf16.msra.mxu0 0
        %2124 = vmatprep.subr.bf16.mxu0 0
        %2125 = vmatpush1.bf16.msra.mxu0 0
        %2126 = vmatprep.subr.bf16.mxu0 0
        %2127 = vmatpush1.bf16.msra.mxu0 0
        %2128 = vmatprep.subr.bf16.mxu0 0
        %2129 = vmatpush1.bf16.msra.mxu0 0
        %2130 = vmatprep.subr.bf16.mxu0 0
        %2131 = vmatpush1.bf16.msra.mxu0 0
        %2132 = vmatprep.subr.bf16.mxu0 0
        %2133 = vmatpush1.bf16.msra.mxu0 0
        %2134 = vmatprep.subr.bf16.mxu0 0
        %2135 = vmatpush1.bf16.msra.mxu0 0
        %2136 = vmatprep.subr.bf16.mxu0 0
        %2137 = vmatpush1.bf16.msra.mxu0 0
        %2138 = vmatprep.subr.bf16.mxu0 0
        %2139 = vmatpush1.bf16.msra.mxu0 0
        %2140 = vmatprep.subr.bf16.mxu0 0
        %2141 = vmatpush1.bf16.msra.mxu0 0
        %2142 = vmatprep.subr.bf16.mxu0 0
        %2143 = vmatpush1.bf16.msra.mxu0 0
        %2144 = vmatprep.subr.bf16.mxu0 0
        %2145 = vmatpush1.bf16.msra.mxu0 0
        %2146 = vmatprep.subr.bf16.mxu0 0
        %2147 = vmatpush1.bf16.msra.mxu0 0
        %2148 = vmatprep.subr.bf16.mxu0 0
        %2149 = vmatpush1.bf16.msra.mxu0 0
        %2150 = vmatprep.subr.bf16.mxu0 0
        %2151 = vmatpush1.bf16.msra.mxu0 0
        %2152 = vmatprep.mubr.bf16.mxu0 0
        %2153 = vmatmul.mubr.bf16.gmra.mrb[0].mxu0 %v2115
        %v2154 = vpop.f32.mrb[0].mxu0
        %v2155 = vadd.f32 0.0, %v2154
        %v2156 = vpop.f32.mrb[0].mxu0
        %v2157 = vpop.f32.mrb[0].mxu0
        %v2158 = vpop.f32.mrb[0].mxu0
        %2159 = vdwg.mxu0
        %v2160 = vrcp.pop %v1954
        %v2161 = vrcp.pop %v1957
        %v2162 = vrcp.pop %v1960
        %v2163 = vrcp.pop %v1963
        %v2164 = vmul.f32 %v2011, %v2160
        %v2165 = vmul.f32 %v2059, %v2161
        %v2166 = vmul.f32 %v2107, %v2162
        %v2167 = vmul.f32 %v2155, %v2163
        %2172 = vrot.lane.b32.xlu0 %v2164, 24
        %v2173 = vpop.permute.xlu0 %2172
        %2174 = vrot.lane.b32.xlu0 %v2165, 24
        %v2175 = vpop.permute.xlu0 %2174
        %2176 = vrot.lane.b32.xlu0 %v2166, 24
        %v2177 = vpop.permute.xlu0 %2176
        %2178 = vrot.lane.b32.xlu0 %v2167, 24
        %v2179 = vpop.permute.xlu0 %2178
        %vm2184 = vcmask 261312
        %2185 = vst.msk [vmem:[#allocation2] sm:$0xff] %vm2184, %v2173
        %2186 = vst.msk [vmem:[#allocation2 + $0x8] sm:$0xff] %vm2184, %v2175
        %2187 = vst.msk [vmem:[#allocation2 + $0x10] sm:$0xff] %vm2184, %v2177
        %2188 = vst.msk [vmem:[#allocation2 + $0x18] sm:$0xff] %vm2184, %v2179
        %v2189 = vld [vmem:[#allocation2] sm:$0xff]
        %v2190 = vld [vmem:[#allocation2 + $0x8] sm:$0xff]
        %v2191 = vld [vmem:[#allocation2 + $0x10] sm:$0xff]
        %v2192 = vld [vmem:[#allocation2 + $0x18] sm:$0xff]
        %v2193 = vpack.c.bf16 %v2190, %v2189
        %v2194 = vpack.c.bf16 %v2192, %v2191
        %v2195 = vld [vmem:[#allocation8] sm:$0xf]
        %v2196 = vld [vmem:[#allocation8 + $0x4] sm:$0xf]
        %v2197 = vld [vmem:[#allocation8 + $0x8] sm:$0xf]
        %v2198 = vld [vmem:[#allocation8 + $0xc] sm:$0xf]
        %v2199 = vld [vmem:[%s4] sm:$0x1]
        %v2201 = vlaneseq
        %v2202 = vshrl.u32 %v2201, 7
        %v2203 = vsub.s32 0, %v2202
        %v2204 = vrot.slane %v2199, %v2203
        %v2210 = vunpack.c.l.b16 %v2195
        %v2211 = vunpack.c.l.b16 %v2196
        %v2212 = vunpack.c.l.b16 %v2197
        %v2213 = vunpack.c.l.b16 %v2198
        %v2214 = vpack.c.b16 %v2211, %v2210
        %v2215 = vpack.c.b16 %v2213, %v2212
        %v2219 = vsel %vm304, %v2193, 0
        %v2222 = vsel %vm304, %v2194, 0
        %2224 = vmatprep.subr.bf16.mxu0 0
        %2225 = vmatpush1.bf16.msra.mxu0 %v2214
        %2226 = vmatprep.subr.bf16.mxu0 0
        %2227 = vmatpush1.bf16.msra.mxu0 %v2215
        %2228 = vmatprep.subr.bf16.mxu0 0
        %2229 = vmatpush1.bf16.msra.mxu0 0
        %2230 = vmatprep.subr.bf16.mxu0 0
        %2231 = vmatpush1.bf16.msra.mxu0 0
        %2232 = vmatprep.subr.bf16.mxu0 0
        %2233 = vmatpush1.bf16.msra.mxu0 0
        %2234 = vmatprep.subr.bf16.mxu0 0
        %2235 = vmatpush1.bf16.msra.mxu0 0
        %2236 = vmatprep.subr.bf16.mxu0 0
        %2237 = vmatpush1.bf16.msra.mxu0 0
        %2238 = vmatprep.subr.bf16.mxu0 0
        %2239 = vmatpush1.bf16.msra.mxu0 0
        %2240 = vmatprep.subr.bf16.mxu0 0
        %2241 = vmatpush1.bf16.msra.mxu0 0
        %2242 = vmatprep.subr.bf16.mxu0 0
        %2243 = vmatpush1.bf16.msra.mxu0 0
        %2244 = vmatprep.subr.bf16.mxu0 0
        %2245 = vmatpush1.bf16.msra.mxu0 0
        %2246 = vmatprep.subr.bf16.mxu0 0
        %2247 = vmatpush1.bf16.msra.mxu0 0
        %2248 = vmatprep.subr.bf16.mxu0 0
        %2249 = vmatpush1.bf16.msra.mxu0 0
        %2250 = vmatprep.subr.bf16.mxu0 0
        %2251 = vmatpush1.bf16.msra.mxu0 0
        %2252 = vmatprep.subr.bf16.mxu0 0
        %2253 = vmatpush1.bf16.msra.mxu0 0
        %2254 = vmatprep.subr.bf16.mxu0 0
        %2255 = vmatpush1.bf16.msra.mxu0 0
        %2256 = vmatprep.mubr.bf16.mxu0 0
        %2257 = vmatmul.mubr.bf16.gmra.mrb[0].mxu0 %v2219
        %v2258 = vpop.f32.mrb[0].mxu0
        %v2259 = vadd.f32 %v2204, %v2258
        %v2260 = vpop.f32.mrb[0].mxu0
        %v2261 = vpop.f32.mrb[0].mxu0
        %v2262 = vadd.f32 %v2204, %v2261
        %v2263 = vpop.f32.mrb[0].mxu0
        %2264 = vmatprep.mubr.bf16.mxu0 0
        %2265 = vmatmul.mubr.bf16.gmra.mrb[0].mxu0 %v2222
        %v2266 = vpop.f32.mrb[0].mxu0
        %v2267 = vadd.f32 %v2204, %v2266
        %v2268 = vpop.f32.mrb[0].mxu0
        %v2269 = vpop.f32.mrb[0].mxu0
        %v2270 = vadd.f32 %v2204, %v2269
        %v2271 = vpop.f32.mrb[0].mxu0
        %2272 = vdwg.mxu0
        %2273 = vst.msk [vmem:[%s271] sm:$0xff] %vm304, %v2259
        %2274 = vst.msk [vmem:[%s271 + $0x8] sm:$0xff] %vm304, %v2262
        %2275 = vst.msk [vmem:[%s271 + $0x10] sm:$0xff] %vm304, %v2267
        %2276 = vst.msk [vmem:[%s271 + $0x18] sm:$0xff] %vm304, %v2270
        %s2277 = sand.u32 %s141, 1
        %s2278 = scalar_lea.sflag [#allocation5], %s2277
        %s2279 = sand.u32 %s141, 1
        %s2280 = smul.addr %s2279, 32
        %s2281 = scalar_lea.vmem [#allocation9], %s2280
        // Predicated region
        $region53: #{tpu_custom_call.1} parent=39 // pred_check
          %p2282 = pneg %p151
        $region54: #{tpu_custom_call.1} parent=39 // pred_check_branch
          %2284 = sbr.rel (%p2282) target = $region56
        $region55: #{tpu_custom_call.1} parent=39 // pred_region
          %s2285 = smul.u32 4, %s23
          %s2287 = ssub.s32 512, 512
          %2288 = vsyncadd %s2278, %s2287
          %s2289 = smul.addr %s2285, 128
          %s2290 = scalar_lea.hbm %s5, %s2289
          %s2291 = sshll.u32 %s2281, 4
          %s2292 = int_to_ptr.vmem [resolvable:$true] %s2291
          %2297 = dma.vmem_to_hbm [thread:$0]  %s2292, 512, %s2290, %s2278, 128, 128, 8
        $region56: #{tpu_custom_call.1} parent=39 // pred_fallthru
          _
      $region40: #{tpu_custom_call.1} parent=5 // pred_fallthru
        _
      %p2298 = scmp.le.s32.totalorder 2, %s18
      // Predicated region
      $region57: #{tpu_custom_call.1} parent=5 // pred_check
        %p2299 = pneg %p2298
      $region58: #{tpu_custom_call.1} parent=5 // pred_check_branch
        %2301 = sbr.rel (%p2299) target = $region60
      $region59: #{tpu_custom_call.1} parent=5 // pred_region
        %s2302 = ssub.s32 %s18, 2
        // Predicated region
        $region61: #{tpu_custom_call.1} parent=59 // pred_check
          %p2303 = pneg %p157
        $region62: #{tpu_custom_call.1} parent=59 // pred_check_branch
          %2305 = sbr.rel (%p2303) target = $region64
        $region63: #{tpu_custom_call.1} parent=59 // pred_region
          %s2306 = sand.u32 %s142, 1
          %s2307 = scalar_lea.sflag [#allocation5], %s2306
          %s2308 = sand.u32 %s142, 1
          %s2309 = smul.addr %s2308, 32
          %s2310 = scalar_lea.vmem [#allocation9], %s2309
          %2311 = dma.done %s2307, 512
        $region64: #{tpu_custom_call.1} parent=59 // pred_fallthru
          _
      $region60: #{tpu_custom_call.1} parent=5 // pred_fallthru
        _
    $region6: #{tpu_custom_call.1} parent=1 // loop_footer
      %s22 = sadd.s32 1, %s18
    $region7: #{tpu_custom_call.1} parent=1 // loop_footer_branch
      %17 = sbr.rel target = $region3
    $region8: #{tpu_custom_call.1} parent=1 // loop_exit
      _
    %2312 = vsyncpa [#allocation4], 1
    %s2313 = scalar_lea.sflag [#allocation4], 1
    %2314 = vsyncpa %s2313, 1
    %2315 = vsyncpa [#allocation7], 1
    %2316 = vsyncpa [#allocation5], 1
    %s2317 = scalar_lea.sflag [#allocation5], 1
    %2318 = vsyncpa %s2317, 1

</llo_original>
